<compile_context>
chip_gen: v6e
topology: v6e:2x2x1
jax: 0.10.0
libtpu: 0.0.40
codegen_flags: <defaults>
</compile_context>

<pallas_src>
import numpy as np
import jax
import jax.numpy as jnp
from jax.experimental import pallas as pl
from jax.experimental.pallas import tpu as pltpu

# ---------------- synthetic (small) config ----------------
DIM_IN = 32            # node feature dim (dim_in)
DIM_OUT = 32           # mlp output dim (dim_out)
HEADS = 4              # cfg.gnn.num_heads
DIM_HEAD = 16          # cfg.gnn.dim_head
EDGE_DIM = 8           # cfg.dataset.edge_dim
MAX_GRAPH_SIZE = 16    # cfg.dataset.max_graph_size
NODES_PER_GRAPH = (6, 8)

INNER = HEADS * DIM_HEAD
NEG_MIN = float(np.finfo(np.float32).min)


# ================= Pallas kernels =================

def attention_kernel(x_ref, mrow_ref, mcol_ref, dist_ref, tab_ref,
                     wqkv_ref, wo_ref, bo_ref, o_ref):
    """One graph per grid step.

    x:(1,N,Din)  mrow:(1,1,N)  mcol:(1,N,1)  dist:(1,N,N) int32
    tab: SMEM (MAX_GRAPH_SIZE, HEADS)
    wqkv:(H,Din,3*Dh) (Q columns pre-scaled)  wo:(H,Dh,Din)  bo:(1,Din)
    out:(1,N,Din)
    """
    x = x_ref[0]                                                  # (N, Din)
    n = x.shape[0]

    # ---- fused QKV: one batched matmul over the head axis ----
    xb = jnp.broadcast_to(x[None], (HEADS, n, DIM_IN))            # (H, N, Din)
    qkv = jax.lax.dot_general(
        xb, wqkv_ref[...], (((2,), (1,)), ((0,), (0,))),
        preferred_element_type=jnp.float32)                       # (H, N, 3*Dh)
    q = qkv[:, :, :DIM_HEAD]                                      # scale folded into wq
    k = qkv[:, :, DIM_HEAD:2 * DIM_HEAD]
    v = qkv[:, :, 2 * DIM_HEAD:]

    # ---- scores for all heads at once ----
    sim = jax.lax.dot_general(
        q, k, (((2,), (2,)), ((0,), (0,))),
        preferred_element_type=jnp.float32)                       # (H, N, N)

    # ---- distance bias gathered in-kernel from the tiny SMEM table ----
    # bias[h, i, j] = table[dist_idx[i, j], h]; compare masks shared over heads.
    # TODO(synk): at production MAX_GRAPH_SIZE this select chain should become
    # a one-hot MXU matmul.
    di = dist_ref[0]                                              # (N, N) int32
    eq = [di == g for g in range(1, MAX_GRAPH_SIZE)]
    head_bias = []
    for h in range(HEADS):
        bh = jnp.full((n, n), tab_ref[0, h], dtype=jnp.float32)
        for g in range(1, MAX_GRAPH_SIZE):
            bh = jnp.where(eq[g - 1], tab_ref[g, h], bh)
        head_bias.append(bh)
    bias = jnp.stack(head_bias, axis=0)                           # (H, N, N)

    # ---- padding mask, hoisted once for all heads ----
    valid = (mcol_ref[0] * mrow_ref[0]) > 0.5                     # (N, N)
    sim = jnp.where(valid[None, :, :], sim + bias, NEG_MIN)       # masked_fill_

    # ---- softmax over keys ----
    m = jnp.max(sim, axis=-1, keepdims=True)
    p = jnp.exp(sim - m)
    l = jnp.sum(p, axis=-1, keepdims=True)
    attn = p / l

    # ---- weighted values + output projection (head concat folded in) ----
    out = jax.lax.dot_general(
        attn, v, (((2,), (1,)), ((0,), (0,))),
        preferred_element_type=jnp.float32)                       # (H, N, Dh)
    yh = jax.lax.dot_general(
        out, wo_ref[...], (((2,), (1,)), ((0,), (0,))),
        preferred_element_type=jnp.float32)                       # (H, N, Din)
    o_ref[0] = jnp.sum(yh, axis=0) + bo_ref[...]                  # (N, Din)


def post_mlp_kernel(attn_ref, edge_ref, inv_ref, w1_ref, b1_ref, alpha_ref,
                    w2_ref, b2_ref, o_ref):
    """Fused: residual add + edge/sqrt(deg) scaling + Linear -> PReLU -> Linear."""
    x = attn_ref[...] + edge_ref[...] * inv_ref[...]              # (M, Din)
    h = jnp.dot(x, w1_ref[...], preferred_element_type=jnp.float32) + b1_ref[...]
    a = alpha_ref[0, 0]                                           # SMEM scalar
    h = jnp.where(h >= 0.0, h, a * h)                             # PReLU
    o_ref[...] = (jnp.dot(h, w2_ref[...],
                          preferred_element_type=jnp.float32) + b2_ref[...])


# ================= wrappers =================

def graphormer_attention(x_dense, mask_row, mask_col, dist_idx, dist_tab,
                         wqkv3, wo3, bo):
    B, N, Din = x_dense.shape
    return pl.pallas_call(
        attention_kernel,
        out_shape=jax.ShapeDtypeStruct((B, N, Din), jnp.float32),
        grid=(B,),
        in_specs=[
            pl.BlockSpec((1, N, Din), lambda b: (b, 0, 0)),
            pl.BlockSpec((1, 1, N), lambda b: (b, 0, 0)),
            pl.BlockSpec((1, N, 1), lambda b: (b, 0, 0)),
            pl.BlockSpec((1, N, N), lambda b: (b, 0, 0)),
            pl.BlockSpec(memory_space=pltpu.MemorySpace.SMEM),     # dist table
            pl.BlockSpec((HEADS, Din, 3 * DIM_HEAD), lambda b: (0, 0, 0)),
            pl.BlockSpec((HEADS, DIM_HEAD, Din), lambda b: (0, 0, 0)),
            pl.BlockSpec((1, Din), lambda b: (0, 0)),
        ],
        out_specs=pl.BlockSpec((1, N, Din), lambda b: (b, 0, 0)),
        compiler_params=pltpu.CompilerParams(
            dimension_semantics=("parallel",)),
    )(x_dense, mask_row, mask_col, dist_idx, dist_tab, wqkv3, wo3, bo)


def pallas_post_mlp(attn_nodes, edge_out, inv_sqrt_deg, w1, b1, alpha, w2, b2):
    M, K = attn_nodes.shape
    H1 = w1.shape[1]
    O = w2.shape[1]
    return pl.pallas_call(
        post_mlp_kernel,
        out_shape=jax.ShapeDtypeStruct((M, O), jnp.float32),
        grid=(1,),
        in_specs=[
            pl.BlockSpec((M, K), lambda i: (0, 0)),
            pl.BlockSpec((M, K), lambda i: (0, 0)),
            pl.BlockSpec((M, 1), lambda i: (0, 0)),
            pl.BlockSpec((K, H1), lambda i: (0, 0)),
            pl.BlockSpec((1, H1), lambda i: (0, 0)),
            pl.BlockSpec(memory_space=pltpu.MemorySpace.SMEM),     # PReLU alpha
            pl.BlockSpec((H1, O), lambda i: (0, 0)),
            pl.BlockSpec((1, O), lambda i: (0, 0)),
        ],
        out_specs=pl.BlockSpec((M, O), lambda i: (0, 0)),
        compiler_params=pltpu.CompilerParams(
            dimension_semantics=("arbitrary",)),
    )(attn_nodes, edge_out, inv_sqrt_deg, w1, b1, alpha, w2, b2)


# ================= full GraphormerLayer forward =================

def prepare_dist_indices(dist_matrices, batch_size, max_nodes):
    """Host-side packing of shortest-path matrices (mirrors the torch loop)."""
    dist_np = np.zeros((batch_size, max_nodes, max_nodes), dtype=np.int32)
    for i, dm in enumerate(dist_matrices):
        dist_np[i, :dm.shape[0], :dm.shape[1]] = dm
    return jnp.minimum(jnp.asarray(dist_np, jnp.int32), MAX_GRAPH_SIZE - 1)


def graphormer_layer_forward(node_feature, edge_index, edge_feature,
                             batch_vec, pos_in_graph, dist_idx, params):
    num_nodes = node_feature.shape[0]
    B, N, _ = dist_idx.shape

    src = edge_index[0]

    # degree(edge_index[0])
    deg = jnp.zeros((num_nodes,), jnp.float32).at[src].add(1.0)

    # centrality encoding gather + to_dense_batch
    deg_idx = jnp.minimum(deg.astype(jnp.int32), MAX_GRAPH_SIZE - 1)
    x_nodes = node_feature + params["centrality"][deg_idx]
    dense = jnp.zeros((B, N, DIM_IN), jnp.float32).at[batch_vec, pos_in_graph].set(x_nodes)
    mask = jnp.zeros((B, N), jnp.float32).at[batch_vec, pos_in_graph].set(1.0)
    mask_row = mask[:, None, :]                                    # (B, 1, N)
    mask_col = mask[:, :, None]                                    # (B, N, 1)

    # per-head weight repack (tiny, done once outside the kernel):
    #   wqkv3[h] = [scale*wq_h | wk_h | wv_h]  -> (H, Din, 3*Dh)
    #   wo3[h]   = wo[h*Dh:(h+1)*Dh, :]        -> (H, Dh, Din)
    scale = DIM_HEAD ** -0.5
    wq_h = params["wq"].reshape(DIM_IN, HEADS, DIM_HEAD) * scale
    wk_h = params["wkv"][:, :INNER].reshape(DIM_IN, HEADS, DIM_HEAD)
    wv_h = params["wkv"][:, INNER:].reshape(DIM_IN, HEADS, DIM_HEAD)
    wqkv3 = jnp.transpose(jnp.concatenate([wq_h, wk_h, wv_h], axis=-1), (1, 0, 2))
    wo3 = params["wo"].reshape(HEADS, DIM_HEAD, DIM_IN)

    # attention (Pallas, one graph per grid step)
    dense_pred = graphormer_attention(dense, mask_row, mask_col, dist_idx,
                                      params["dist_bias"], wqkv3, wo3,
                                      params["bo"])

    # edge-feature projection (plain jnp, XLA fuses) + scatter_add over sources
    proj_e = edge_feature @ params["we"] + params["be"]
    edge_out = jnp.zeros((num_nodes, DIM_IN), jnp.float32).at[src].add(proj_e)

    # dense_batch_predictions[dense_batch_mask] == gather by (batch, pos)
    attn_nodes = dense_pred[batch_vec, pos_in_graph]
    inv_sqrt_deg = (1.0 / jnp.sqrt(jnp.maximum(deg, 1.0)))[:, None]

    # fused residual + scaling + Linear -> PReLU -> Linear (Pallas)
    return pallas_post_mlp(attn_nodes, edge_out, inv_sqrt_deg,
                           params["w1"], params["b1"], params["alpha"],
                           params["w2"], params["b2"])


graphormer_layer_forward_jit = jax.jit(graphormer_layer_forward)


# ================= main =================

if __name__ == "__main__":
    key = jax.random.PRNGKey(0)
    ks = jax.random.split(key, 16)

    num_nodes = sum(NODES_PER_GRAPH)
    B = len(NODES_PER_GRAPH)
    N = max(NODES_PER_GRAPH)

    # deterministic graph structure: a bidirectional ring per graph
    src_list, dst_list = [], []
    start = 0
    for n in NODES_PER_GRAPH:
        for u in range(n):
            v = (u + 1) % n
            src_list += [start + u, start + v]
            dst_list += [start + v, start + u]
        start += n
    edge_index = jnp.asarray(np.stack([src_list, dst_list]), dtype=jnp.int32)
    E = edge_index.shape[1]

    batch_vec = jnp.asarray(
        np.concatenate([np.full(n, i) for i, n in enumerate(NODES_PER_GRAPH)]),
        dtype=jnp.int32)
    pos_in_graph = jnp.asarray(
        np.concatenate([np.arange(n) for n in NODES_PER_GRAPH]), dtype=jnp.int32)

    # synthetic shortest-path distance matrices (int, one per graph)
    rng = np.random.default_rng(0)
    dist_matrices = [rng.integers(0, MAX_GRAPH_SIZE + 4, size=(n, n)).astype(np.int32)
                     for n in NODES_PER_GRAPH]
    dist_idx = prepare_dist_indices(dist_matrices, B, N)

    # inputs
    node_feature = jax.random.normal(ks[0], (num_nodes, DIM_IN), jnp.float32)
    edge_feature = jax.random.normal(ks[1], (E, EDGE_DIM), jnp.float32)

    # deterministic parameter init (synthetic; module inits some of these to
    # zero, we use small random values to exercise all code paths)
    s = 0.05
    params = {
        "dist_bias": s * jax.random.normal(ks[2], (MAX_GRAPH_SIZE, HEADS), jnp.float32),
        "centrality": s * jax.random.normal(ks[3], (MAX_GRAPH_SIZE, DIM_IN), jnp.float32),
        "wq": s * jax.random.normal(ks[4], (DIM_IN, INNER), jnp.float32),
        "wkv": s * jax.random.normal(ks[5], (DIM_IN, 2 * INNER), jnp.float32),
        "wo": s * jax.random.normal(ks[6], (INNER, DIM_IN), jnp.float32),
        "bo": s * jax.random.normal(ks[7], (1, DIM_IN), jnp.float32),
        "we": s * jax.random.normal(ks[8], (EDGE_DIM, DIM_IN), jnp.float32),
        "be": s * jax.random.normal(ks[9], (1, DIM_IN), jnp.float32),
        "w1": s * jax.random.normal(ks[10], (DIM_IN, DIM_OUT), jnp.float32),
        "b1": s * jax.random.normal(ks[11], (1, DIM_OUT), jnp.float32),
        "alpha": jnp.full((1, 1), 0.25, jnp.float32),     # nn.PReLU() default
        "w2": s * jax.random.normal(ks[12], (DIM_OUT, DIM_OUT), jnp.float32),
        "b2": s * jax.random.normal(ks[13], (1, DIM_OUT), jnp.float32),
    }

    out = graphormer_layer_forward_jit(node_feature, edge_index, edge_feature,
                                       batch_vec, pos_in_graph, dist_idx, params)
    jax.block_until_ready(out)
    assert out.shape == (num_nodes, DIM_OUT)
    print("KERNEL_OK")
</pallas_src>

<mosaic_0001>
module attributes {stable_mosaic.version = 11 : i64} {
  func.func @attention_kernel(%arg0: i32, %arg1: memref<1x8x32xf32, #tpu.memory_space<vmem>>, %arg2: memref<1x1x8xf32, #tpu.memory_space<vmem>>, %arg3: memref<1x8x1xf32, #tpu.memory_space<vmem>>, %arg4: memref<1x8x8xi32, #tpu.memory_space<vmem>>, %arg5: memref<16x4xf32, #tpu.memory_space<smem>>, %arg6: memref<4x32x48xf32, #tpu.memory_space<vmem>>, %arg7: memref<4x16x32xf32, #tpu.memory_space<vmem>>, %arg8: memref<1x32xf32, #tpu.memory_space<vmem>>, %arg9: memref<1x8x32xf32, #tpu.memory_space<vmem>>) attributes {dimension_semantics = [#tpu.dimension_semantics<parallel>], iteration_bounds = array<i64: 2>, scalar_prefetch = 0 : i64, scratch_operands = 0 : i64, tpu.core_type = #tpu.core_type<tc>, window_params = [{transform_indices = @transform_0, window_bounds = array<i64: 1, 8, 32>}, {transform_indices = @transform_1, window_bounds = array<i64: 1, 1, 8>}, {transform_indices = @transform_2, window_bounds = array<i64: 1, 8, 1>}, {transform_indices = @transform_3, window_bounds = array<i64: 1, 8, 8>}, {transform_indices = @transform_4, window_bounds = array<i64: 16, 4>}, {pipeline_mode = #tpu.pipeline_mode<synchronous>, transform_indices = @transform_5, window_bounds = array<i64: 4, 32, 48>}, {pipeline_mode = #tpu.pipeline_mode<synchronous>, transform_indices = @transform_6, window_bounds = array<i64: 4, 16, 32>}, {pipeline_mode = #tpu.pipeline_mode<synchronous>, transform_indices = @transform_7, window_bounds = array<i64: 1, 32>}, {transform_indices = @transform_8, window_bounds = array<i64: 1, 8, 32>}]} {
    %c0 = arith.constant 0 : index
    %c0_0 = arith.constant 0 : index
    %c0_1 = arith.constant 0 : index
    %0 = vector.load %arg1[%c0, %c0_0, %c0_1] : memref<1x8x32xf32, #tpu.memory_space<vmem>>, vector<1x8x32xf32>
    %1 = vector.shape_cast %0 : vector<1x8x32xf32> to vector<8x32xf32>
    %2 = vector.shape_cast %1 : vector<8x32xf32> to vector<1x8x32xf32>
    %3 = vector.shape_cast %2 : vector<1x8x32xf32> to vector<1x8x32xf32>
    %4 = vector.broadcast %3 : vector<1x8x32xf32> to vector<4x8x32xf32>
    %c0_2 = arith.constant 0 : index
    %c0_3 = arith.constant 0 : index
    %c0_4 = arith.constant 0 : index
    %5 = vector.load %arg6[%c0_2, %c0_3, %c0_4] : memref<4x32x48xf32, #tpu.memory_space<vmem>>, vector<4x32x48xf32>
    %cst = arith.constant dense<0.000000e+00> : vector<4x8x48xf32>
    %6 = tpu.matmul %4, %5, %cst {dimension_numbers = #tpu.dot_dimension_numbers<[2], [1], [1], [2], [0, 0, 0, 1, 1, 2], [0], [0]>} : vector<4x8x32xf32>, vector<4x32x48xf32>, vector<4x8x48xf32> -> vector<4x8x48xf32>
    %7 = vector.extract_strided_slice %6 {offsets = [0, 0, 0], sizes = [4, 8, 16], strides = [1, 1, 1]} : vector<4x8x48xf32> to vector<4x8x16xf32>
    %8 = vector.extract_strided_slice %6 {offsets = [0, 0, 16], sizes = [4, 8, 16], strides = [1, 1, 1]} : vector<4x8x48xf32> to vector<4x8x16xf32>
    %9 = vector.extract_strided_slice %6 {offsets = [0, 0, 32], sizes = [4, 8, 16], strides = [1, 1, 1]} : vector<4x8x48xf32> to vector<4x8x16xf32>
    %cst_5 = arith.constant dense<0.000000e+00> : vector<4x8x8xf32>
    %10 = tpu.matmul %7, %8, %cst_5 {dimension_numbers = #tpu.dot_dimension_numbers<[2], [2], [1], [1], [0, 0, 0, 1, 1, 1], [0], [0]>} : vector<4x8x16xf32>, vector<4x8x16xf32>, vector<4x8x8xf32> -> vector<4x8x8xf32>
    %c0_6 = arith.constant 0 : index
    %c0_7 = arith.constant 0 : index
    %c0_8 = arith.constant 0 : index
    %11 = vector.load %arg4[%c0_6, %c0_7, %c0_8] : memref<1x8x8xi32, #tpu.memory_space<vmem>>, vector<1x8x8xi32>
    %12 = vector.shape_cast %11 : vector<1x8x8xi32> to vector<8x8xi32>
    %c1_i32 = arith.constant 1 : i32
    %13 = vector.broadcast %c1_i32 : i32 to vector<8x8xi32>
    %14 = arith.cmpi eq, %12, %13 : vector<8x8xi32>
    %c2_i32 = arith.constant 2 : i32
    %15 = vector.broadcast %c2_i32 : i32 to vector<8x8xi32>
    %16 = arith.cmpi eq, %12, %15 : vector<8x8xi32>
    %c3_i32 = arith.constant 3 : i32
    %17 = vector.broadcast %c3_i32 : i32 to vector<8x8xi32>
    %18 = arith.cmpi eq, %12, %17 : vector<8x8xi32>
    %c4_i32 = arith.constant 4 : i32
    %19 = vector.broadcast %c4_i32 : i32 to vector<8x8xi32>
    %20 = arith.cmpi eq, %12, %19 : vector<8x8xi32>
    %c5_i32 = arith.constant 5 : i32
    %21 = vector.broadcast %c5_i32 : i32 to vector<8x8xi32>
    %22 = arith.cmpi eq, %12, %21 : vector<8x8xi32>
    %c6_i32 = arith.constant 6 : i32
    %23 = vector.broadcast %c6_i32 : i32 to vector<8x8xi32>
    %24 = arith.cmpi eq, %12, %23 : vector<8x8xi32>
    %c7_i32 = arith.constant 7 : i32
    %25 = vector.broadcast %c7_i32 : i32 to vector<8x8xi32>
    %26 = arith.cmpi eq, %12, %25 : vector<8x8xi32>
    %c8_i32 = arith.constant 8 : i32
    %27 = vector.broadcast %c8_i32 : i32 to vector<8x8xi32>
    %28 = arith.cmpi eq, %12, %27 : vector<8x8xi32>
    %c9_i32 = arith.constant 9 : i32
    %29 = vector.broadcast %c9_i32 : i32 to vector<8x8xi32>
    %30 = arith.cmpi eq, %12, %29 : vector<8x8xi32>
    %c10_i32 = arith.constant 10 : i32
    %31 = vector.broadcast %c10_i32 : i32 to vector<8x8xi32>
    %32 = arith.cmpi eq, %12, %31 : vector<8x8xi32>
    %c11_i32 = arith.constant 11 : i32
    %33 = vector.broadcast %c11_i32 : i32 to vector<8x8xi32>
    %34 = arith.cmpi eq, %12, %33 : vector<8x8xi32>
    %c12_i32 = arith.constant 12 : i32
    %35 = vector.broadcast %c12_i32 : i32 to vector<8x8xi32>
    %36 = arith.cmpi eq, %12, %35 : vector<8x8xi32>
    %c13_i32 = arith.constant 13 : i32
    %37 = vector.broadcast %c13_i32 : i32 to vector<8x8xi32>
    %38 = arith.cmpi eq, %12, %37 : vector<8x8xi32>
    %c14_i32 = arith.constant 14 : i32
    %39 = vector.broadcast %c14_i32 : i32 to vector<8x8xi32>
    %40 = arith.cmpi eq, %12, %39 : vector<8x8xi32>
    %c15_i32 = arith.constant 15 : i32
    %41 = vector.broadcast %c15_i32 : i32 to vector<8x8xi32>
    %42 = arith.cmpi eq, %12, %41 : vector<8x8xi32>
    %c0_9 = arith.constant 0 : index
    %c0_10 = arith.constant 0 : index
    %43 = memref.load %arg5[%c0_9, %c0_10] : memref<16x4xf32, #tpu.memory_space<smem>>
    %44 = vector.broadcast %43 : f32 to vector<8x8xf32>
    %c1 = arith.constant 1 : index
    %c0_11 = arith.constant 0 : index
    %45 = memref.load %arg5[%c1, %c0_11] : memref<16x4xf32, #tpu.memory_space<smem>>
    %46 = vector.broadcast %45 : f32 to vector<8x8xf32>
    %47 = arith.select %14, %46, %44 : vector<8x8xi1>, vector<8x8xf32>
    %c2 = arith.constant 2 : index
    %c0_12 = arith.constant 0 : index
    %48 = memref.load %arg5[%c2, %c0_12] : memref<16x4xf32, #tpu.memory_space<smem>>
    %49 = vector.broadcast %48 : f32 to vector<8x8xf32>
    %50 = arith.select %16, %49, %47 : vector<8x8xi1>, vector<8x8xf32>
    %c3 = arith.constant 3 : index
    %c0_13 = arith.constant 0 : index
    %51 = memref.load %arg5[%c3, %c0_13] : memref<16x4xf32, #tpu.memory_space<smem>>
    %52 = vector.broadcast %51 : f32 to vector<8x8xf32>
    %53 = arith.select %18, %52, %50 : vector<8x8xi1>, vector<8x8xf32>
    %c4 = arith.constant 4 : index
    %c0_14 = arith.constant 0 : index
    %54 = memref.load %arg5[%c4, %c0_14] : memref<16x4xf32, #tpu.memory_space<smem>>
    %55 = vector.broadcast %54 : f32 to vector<8x8xf32>
    %56 = arith.select %20, %55, %53 : vector<8x8xi1>, vector<8x8xf32>
    %c5 = arith.constant 5 : index
    %c0_15 = arith.constant 0 : index
    %57 = memref.load %arg5[%c5, %c0_15] : memref<16x4xf32, #tpu.memory_space<smem>>
    %58 = vector.broadcast %57 : f32 to vector<8x8xf32>
    %59 = arith.select %22, %58, %56 : vector<8x8xi1>, vector<8x8xf32>
    %c6 = arith.constant 6 : index
    %c0_16 = arith.constant 0 : index
    %60 = memref.load %arg5[%c6, %c0_16] : memref<16x4xf32, #tpu.memory_space<smem>>
    %61 = vector.broadcast %60 : f32 to vector<8x8xf32>
    %62 = arith.select %24, %61, %59 : vector<8x8xi1>, vector<8x8xf32>
    %c7 = arith.constant 7 : index
    %c0_17 = arith.constant 0 : index
    %63 = memref.load %arg5[%c7, %c0_17] : memref<16x4xf32, #tpu.memory_space<smem>>
    %64 = vector.broadcast %63 : f32 to vector<8x8xf32>
    %65 = arith.select %26, %64, %62 : vector<8x8xi1>, vector<8x8xf32>
    %c8 = arith.constant 8 : index
    %c0_18 = arith.constant 0 : index
    %66 = memref.load %arg5[%c8, %c0_18] : memref<16x4xf32, #tpu.memory_space<smem>>
    %67 = vector.broadcast %66 : f32 to vector<8x8xf32>
    %68 = arith.select %28, %67, %65 : vector<8x8xi1>, vector<8x8xf32>
    %c9 = arith.constant 9 : index
    %c0_19 = arith.constant 0 : index
    %69 = memref.load %arg5[%c9, %c0_19] : memref<16x4xf32, #tpu.memory_space<smem>>
    %70 = vector.broadcast %69 : f32 to vector<8x8xf32>
    %71 = arith.select %30, %70, %68 : vector<8x8xi1>, vector<8x8xf32>
    %c10 = arith.constant 10 : index
    %c0_20 = arith.constant 0 : index
    %72 = memref.load %arg5[%c10, %c0_20] : memref<16x4xf32, #tpu.memory_space<smem>>
    %73 = vector.broadcast %72 : f32 to vector<8x8xf32>
    %74 = arith.select %32, %73, %71 : vector<8x8xi1>, vector<8x8xf32>
    %c11 = arith.constant 11 : index
    %c0_21 = arith.constant 0 : index
    %75 = memref.load %arg5[%c11, %c0_21] : memref<16x4xf32, #tpu.memory_space<smem>>
    %76 = vector.broadcast %75 : f32 to vector<8x8xf32>
    %77 = arith.select %34, %76, %74 : vector<8x8xi1>, vector<8x8xf32>
    %c12 = arith.constant 12 : index
    %c0_22 = arith.constant 0 : index
    %78 = memref.load %arg5[%c12, %c0_22] : memref<16x4xf32, #tpu.memory_space<smem>>
    %79 = vector.broadcast %78 : f32 to vector<8x8xf32>
    %80 = arith.select %36, %79, %77 : vector<8x8xi1>, vector<8x8xf32>
    %c13 = arith.constant 13 : index
    %c0_23 = arith.constant 0 : index
    %81 = memref.load %arg5[%c13, %c0_23] : memref<16x4xf32, #tpu.memory_space<smem>>
    %82 = vector.broadcast %81 : f32 to vector<8x8xf32>
    %83 = arith.select %38, %82, %80 : vector<8x8xi1>, vector<8x8xf32>
    %c14 = arith.constant 14 : index
    %c0_24 = arith.constant 0 : index
    %84 = memref.load %arg5[%c14, %c0_24] : memref<16x4xf32, #tpu.memory_space<smem>>
    %85 = vector.broadcast %84 : f32 to vector<8x8xf32>
    %86 = arith.select %40, %85, %83 : vector<8x8xi1>, vector<8x8xf32>
    %c15 = arith.constant 15 : index
    %c0_25 = arith.constant 0 : index
    %87 = memref.load %arg5[%c15, %c0_25] : memref<16x4xf32, #tpu.memory_space<smem>>
    %88 = vector.broadcast %87 : f32 to vector<8x8xf32>
    %89 = arith.select %42, %88, %86 : vector<8x8xi1>, vector<8x8xf32>
    %c0_26 = arith.constant 0 : index
    %c1_27 = arith.constant 1 : index
    %90 = memref.load %arg5[%c0_26, %c1_27] : memref<16x4xf32, #tpu.memory_space<smem>>
    %91 = vector.broadcast %90 : f32 to vector<8x8xf32>
    %c1_28 = arith.constant 1 : index
    %c1_29 = arith.constant 1 : index
    %92 = memref.load %arg5[%c1_28, %c1_29] : memref<16x4xf32, #tpu.memory_space<smem>>
    %93 = vector.broadcast %92 : f32 to vector<8x8xf32>
    %94 = arith.select %14, %93, %91 : vector<8x8xi1>, vector<8x8xf32>
    %c2_30 = arith.constant 2 : index
    %c1_31 = arith.constant 1 : index
    %95 = memref.load %arg5[%c2_30, %c1_31] : memref<16x4xf32, #tpu.memory_space<smem>>
    %96 = vector.broadcast %95 : f32 to vector<8x8xf32>
    %97 = arith.select %16, %96, %94 : vector<8x8xi1>, vector<8x8xf32>
    %c3_32 = arith.constant 3 : index
    %c1_33 = arith.constant 1 : index
    %98 = memref.load %arg5[%c3_32, %c1_33] : memref<16x4xf32, #tpu.memory_space<smem>>
    %99 = vector.broadcast %98 : f32 to vector<8x8xf32>
    %100 = arith.select %18, %99, %97 : vector<8x8xi1>, vector<8x8xf32>
    %c4_34 = arith.constant 4 : index
    %c1_35 = arith.constant 1 : index
    %101 = memref.load %arg5[%c4_34, %c1_35] : memref<16x4xf32, #tpu.memory_space<smem>>
    %102 = vector.broadcast %101 : f32 to vector<8x8xf32>
    %103 = arith.select %20, %102, %100 : vector<8x8xi1>, vector<8x8xf32>
    %c5_36 = arith.constant 5 : index
    %c1_37 = arith.constant 1 : index
    %104 = memref.load %arg5[%c5_36, %c1_37] : memref<16x4xf32, #tpu.memory_space<smem>>
    %105 = vector.broadcast %104 : f32 to vector<8x8xf32>
    %106 = arith.select %22, %105, %103 : vector<8x8xi1>, vector<8x8xf32>
    %c6_38 = arith.constant 6 : index
    %c1_39 = arith.constant 1 : index
    %107 = memref.load %arg5[%c6_38, %c1_39] : memref<16x4xf32, #tpu.memory_space<smem>>
    %108 = vector.broadcast %107 : f32 to vector<8x8xf32>
    %109 = arith.select %24, %108, %106 : vector<8x8xi1>, vector<8x8xf32>
    %c7_40 = arith.constant 7 : index
    %c1_41 = arith.constant 1 : index
    %110 = memref.load %arg5[%c7_40, %c1_41] : memref<16x4xf32, #tpu.memory_space<smem>>
    %111 = vector.broadcast %110 : f32 to vector<8x8xf32>
    %112 = arith.select %26, %111, %109 : vector<8x8xi1>, vector<8x8xf32>
    %c8_42 = arith.constant 8 : index
    %c1_43 = arith.constant 1 : index
    %113 = memref.load %arg5[%c8_42, %c1_43] : memref<16x4xf32, #tpu.memory_space<smem>>
    %114 = vector.broadcast %113 : f32 to vector<8x8xf32>
    %115 = arith.select %28, %114, %112 : vector<8x8xi1>, vector<8x8xf32>
    %c9_44 = arith.constant 9 : index
    %c1_45 = arith.constant 1 : index
    %116 = memref.load %arg5[%c9_44, %c1_45] : memref<16x4xf32, #tpu.memory_space<smem>>
    %117 = vector.broadcast %116 : f32 to vector<8x8xf32>
    %118 = arith.select %30, %117, %115 : vector<8x8xi1>, vector<8x8xf32>
    %c10_46 = arith.constant 10 : index
    %c1_47 = arith.constant 1 : index
    %119 = memref.load %arg5[%c10_46, %c1_47] : memref<16x4xf32, #tpu.memory_space<smem>>
    %120 = vector.broadcast %119 : f32 to vector<8x8xf32>
    %121 = arith.select %32, %120, %118 : vector<8x8xi1>, vector<8x8xf32>
    %c11_48 = arith.constant 11 : index
    %c1_49 = arith.constant 1 : index
    %122 = memref.load %arg5[%c11_48, %c1_49] : memref<16x4xf32, #tpu.memory_space<smem>>
    %123 = vector.broadcast %122 : f32 to vector<8x8xf32>
    %124 = arith.select %34, %123, %121 : vector<8x8xi1>, vector<8x8xf32>
    %c12_50 = arith.constant 12 : index
    %c1_51 = arith.constant 1 : index
    %125 = memref.load %arg5[%c12_50, %c1_51] : memref<16x4xf32, #tpu.memory_space<smem>>
    %126 = vector.broadcast %125 : f32 to vector<8x8xf32>
    %127 = arith.select %36, %126, %124 : vector<8x8xi1>, vector<8x8xf32>
    %c13_52 = arith.constant 13 : index
    %c1_53 = arith.constant 1 : index
    %128 = memref.load %arg5[%c13_52, %c1_53] : memref<16x4xf32, #tpu.memory_space<smem>>
    %129 = vector.broadcast %128 : f32 to vector<8x8xf32>
    %130 = arith.select %38, %129, %127 : vector<8x8xi1>, vector<8x8xf32>
    %c14_54 = arith.constant 14 : index
    %c1_55 = arith.constant 1 : index
    %131 = memref.load %arg5[%c14_54, %c1_55] : memref<16x4xf32, #tpu.memory_space<smem>>
    %132 = vector.broadcast %131 : f32 to vector<8x8xf32>
    %133 = arith.select %40, %132, %130 : vector<8x8xi1>, vector<8x8xf32>
    %c15_56 = arith.constant 15 : index
    %c1_57 = arith.constant 1 : index
    %134 = memref.load %arg5[%c15_56, %c1_57] : memref<16x4xf32, #tpu.memory_space<smem>>
    %135 = vector.broadcast %134 : f32 to vector<8x8xf32>
    %136 = arith.select %42, %135, %133 : vector<8x8xi1>, vector<8x8xf32>
    %c0_58 = arith.constant 0 : index
    %c2_59 = arith.constant 2 : index
    %137 = memref.load %arg5[%c0_58, %c2_59] : memref<16x4xf32, #tpu.memory_space<smem>>
    %138 = vector.broadcast %137 : f32 to vector<8x8xf32>
    %c1_60 = arith.constant 1 : index
    %c2_61 = arith.constant 2 : index
    %139 = memref.load %arg5[%c1_60, %c2_61] : memref<16x4xf32, #tpu.memory_space<smem>>
    %140 = vector.broadcast %139 : f32 to vector<8x8xf32>
    %141 = arith.select %14, %140, %138 : vector<8x8xi1>, vector<8x8xf32>
    %c2_62 = arith.constant 2 : index
    %c2_63 = arith.constant 2 : index
    %142 = memref.load %arg5[%c2_62, %c2_63] : memref<16x4xf32, #tpu.memory_space<smem>>
    %143 = vector.broadcast %142 : f32 to vector<8x8xf32>
    %144 = arith.select %16, %143, %141 : vector<8x8xi1>, vector<8x8xf32>
    %c3_64 = arith.constant 3 : index
    %c2_65 = arith.constant 2 : index
    %145 = memref.load %arg5[%c3_64, %c2_65] : memref<16x4xf32, #tpu.memory_space<smem>>
    %146 = vector.broadcast %145 : f32 to vector<8x8xf32>
    %147 = arith.select %18, %146, %144 : vector<8x8xi1>, vector<8x8xf32>
    %c4_66 = arith.constant 4 : index
    %c2_67 = arith.constant 2 : index
    %148 = memref.load %arg5[%c4_66, %c2_67] : memref<16x4xf32, #tpu.memory_space<smem>>
    %149 = vector.broadcast %148 : f32 to vector<8x8xf32>
    %150 = arith.select %20, %149, %147 : vector<8x8xi1>, vector<8x8xf32>
    %c5_68 = arith.constant 5 : index
    %c2_69 = arith.constant 2 : index
    %151 = memref.load %arg5[%c5_68, %c2_69] : memref<16x4xf32, #tpu.memory_space<smem>>
    %152 = vector.broadcast %151 : f32 to vector<8x8xf32>
    %153 = arith.select %22, %152, %150 : vector<8x8xi1>, vector<8x8xf32>
    %c6_70 = arith.constant 6 : index
    %c2_71 = arith.constant 2 : index
    %154 = memref.load %arg5[%c6_70, %c2_71] : memref<16x4xf32, #tpu.memory_space<smem>>
    %155 = vector.broadcast %154 : f32 to vector<8x8xf32>
    %156 = arith.select %24, %155, %153 : vector<8x8xi1>, vector<8x8xf32>
    %c7_72 = arith.constant 7 : index
    %c2_73 = arith.constant 2 : index
    %157 = memref.load %arg5[%c7_72, %c2_73] : memref<16x4xf32, #tpu.memory_space<smem>>
    %158 = vector.broadcast %157 : f32 to vector<8x8xf32>
    %159 = arith.select %26, %158, %156 : vector<8x8xi1>, vector<8x8xf32>
    %c8_74 = arith.constant 8 : index
    %c2_75 = arith.constant 2 : index
    %160 = memref.load %arg5[%c8_74, %c2_75] : memref<16x4xf32, #tpu.memory_space<smem>>
    %161 = vector.broadcast %160 : f32 to vector<8x8xf32>
    %162 = arith.select %28, %161, %159 : vector<8x8xi1>, vector<8x8xf32>
    %c9_76 = arith.constant 9 : index
    %c2_77 = arith.constant 2 : index
    %163 = memref.load %arg5[%c9_76, %c2_77] : memref<16x4xf32, #tpu.memory_space<smem>>
    %164 = vector.broadcast %163 : f32 to vector<8x8xf32>
    %165 = arith.select %30, %164, %162 : vector<8x8xi1>, vector<8x8xf32>
    %c10_78 = arith.constant 10 : index
    %c2_79 = arith.constant 2 : index
    %166 = memref.load %arg5[%c10_78, %c2_79] : memref<16x4xf32, #tpu.memory_space<smem>>
    %167 = vector.broadcast %166 : f32 to vector<8x8xf32>
    %168 = arith.select %32, %167, %165 : vector<8x8xi1>, vector<8x8xf32>
    %c11_80 = arith.constant 11 : index
    %c2_81 = arith.constant 2 : index
    %169 = memref.load %arg5[%c11_80, %c2_81] : memref<16x4xf32, #tpu.memory_space<smem>>
    %170 = vector.broadcast %169 : f32 to vector<8x8xf32>
    %171 = arith.select %34, %170, %168 : vector<8x8xi1>, vector<8x8xf32>
    %c12_82 = arith.constant 12 : index
    %c2_83 = arith.constant 2 : index
    %172 = memref.load %arg5[%c12_82, %c2_83] : memref<16x4xf32, #tpu.memory_space<smem>>
    %173 = vector.broadcast %172 : f32 to vector<8x8xf32>
    %174 = arith.select %36, %173, %171 : vector<8x8xi1>, vector<8x8xf32>
    %c13_84 = arith.constant 13 : index
    %c2_85 = arith.constant 2 : index
    %175 = memref.load %arg5[%c13_84, %c2_85] : memref<16x4xf32, #tpu.memory_space<smem>>
    %176 = vector.broadcast %175 : f32 to vector<8x8xf32>
    %177 = arith.select %38, %176, %174 : vector<8x8xi1>, vector<8x8xf32>
    %c14_86 = arith.constant 14 : index
    %c2_87 = arith.constant 2 : index
    %178 = memref.load %arg5[%c14_86, %c2_87] : memref<16x4xf32, #tpu.memory_space<smem>>
    %179 = vector.broadcast %178 : f32 to vector<8x8xf32>
    %180 = arith.select %40, %179, %177 : vector<8x8xi1>, vector<8x8xf32>
    %c15_88 = arith.constant 15 : index
    %c2_89 = arith.constant 2 : index
    %181 = memref.load %arg5[%c15_88, %c2_89] : memref<16x4xf32, #tpu.memory_space<smem>>
    %182 = vector.broadcast %181 : f32 to vector<8x8xf32>
    %183 = arith.select %42, %182, %180 : vector<8x8xi1>, vector<8x8xf32>
    %c0_90 = arith.constant 0 : index
    %c3_91 = arith.constant 3 : index
    %184 = memref.load %arg5[%c0_90, %c3_91] : memref<16x4xf32, #tpu.memory_space<smem>>
    %185 = vector.broadcast %184 : f32 to vector<8x8xf32>
    %c1_92 = arith.constant 1 : index
    %c3_93 = arith.constant 3 : index
    %186 = memref.load %arg5[%c1_92, %c3_93] : memref<16x4xf32, #tpu.memory_space<smem>>
    %187 = vector.broadcast %186 : f32 to vector<8x8xf32>
    %188 = arith.select %14, %187, %185 : vector<8x8xi1>, vector<8x8xf32>
    %c2_94 = arith.constant 2 : index
    %c3_95 = arith.constant 3 : index
    %189 = memref.load %arg5[%c2_94, %c3_95] : memref<16x4xf32, #tpu.memory_space<smem>>
    %190 = vector.broadcast %189 : f32 to vector<8x8xf32>
    %191 = arith.select %16, %190, %188 : vector<8x8xi1>, vector<8x8xf32>
    %c3_96 = arith.constant 3 : index
    %c3_97 = arith.constant 3 : index
    %192 = memref.load %arg5[%c3_96, %c3_97] : memref<16x4xf32, #tpu.memory_space<smem>>
    %193 = vector.broadcast %192 : f32 to vector<8x8xf32>
    %194 = arith.select %18, %193, %191 : vector<8x8xi1>, vector<8x8xf32>
    %c4_98 = arith.constant 4 : index
    %c3_99 = arith.constant 3 : index
    %195 = memref.load %arg5[%c4_98, %c3_99] : memref<16x4xf32, #tpu.memory_space<smem>>
    %196 = vector.broadcast %195 : f32 to vector<8x8xf32>
    %197 = arith.select %20, %196, %194 : vector<8x8xi1>, vector<8x8xf32>
    %c5_100 = arith.constant 5 : index
    %c3_101 = arith.constant 3 : index
    %198 = memref.load %arg5[%c5_100, %c3_101] : memref<16x4xf32, #tpu.memory_space<smem>>
    %199 = vector.broadcast %198 : f32 to vector<8x8xf32>
    %200 = arith.select %22, %199, %197 : vector<8x8xi1>, vector<8x8xf32>
    %c6_102 = arith.constant 6 : index
    %c3_103 = arith.constant 3 : index
    %201 = memref.load %arg5[%c6_102, %c3_103] : memref<16x4xf32, #tpu.memory_space<smem>>
    %202 = vector.broadcast %201 : f32 to vector<8x8xf32>
    %203 = arith.select %24, %202, %200 : vector<8x8xi1>, vector<8x8xf32>
    %c7_104 = arith.constant 7 : index
    %c3_105 = arith.constant 3 : index
    %204 = memref.load %arg5[%c7_104, %c3_105] : memref<16x4xf32, #tpu.memory_space<smem>>
    %205 = vector.broadcast %204 : f32 to vector<8x8xf32>
    %206 = arith.select %26, %205, %203 : vector<8x8xi1>, vector<8x8xf32>
    %c8_106 = arith.constant 8 : index
    %c3_107 = arith.constant 3 : index
    %207 = memref.load %arg5[%c8_106, %c3_107] : memref<16x4xf32, #tpu.memory_space<smem>>
    %208 = vector.broadcast %207 : f32 to vector<8x8xf32>
    %209 = arith.select %28, %208, %206 : vector<8x8xi1>, vector<8x8xf32>
    %c9_108 = arith.constant 9 : index
    %c3_109 = arith.constant 3 : index
    %210 = memref.load %arg5[%c9_108, %c3_109] : memref<16x4xf32, #tpu.memory_space<smem>>
    %211 = vector.broadcast %210 : f32 to vector<8x8xf32>
    %212 = arith.select %30, %211, %209 : vector<8x8xi1>, vector<8x8xf32>
    %c10_110 = arith.constant 10 : index
    %c3_111 = arith.constant 3 : index
    %213 = memref.load %arg5[%c10_110, %c3_111] : memref<16x4xf32, #tpu.memory_space<smem>>
    %214 = vector.broadcast %213 : f32 to vector<8x8xf32>
    %215 = arith.select %32, %214, %212 : vector<8x8xi1>, vector<8x8xf32>
    %c11_112 = arith.constant 11 : index
    %c3_113 = arith.constant 3 : index
    %216 = memref.load %arg5[%c11_112, %c3_113] : memref<16x4xf32, #tpu.memory_space<smem>>
    %217 = vector.broadcast %216 : f32 to vector<8x8xf32>
    %218 = arith.select %34, %217, %215 : vector<8x8xi1>, vector<8x8xf32>
    %c12_114 = arith.constant 12 : index
    %c3_115 = arith.constant 3 : index
    %219 = memref.load %arg5[%c12_114, %c3_115] : memref<16x4xf32, #tpu.memory_space<smem>>
    %220 = vector.broadcast %219 : f32 to vector<8x8xf32>
    %221 = arith.select %36, %220, %218 : vector<8x8xi1>, vector<8x8xf32>
    %c13_116 = arith.constant 13 : index
    %c3_117 = arith.constant 3 : index
    %222 = memref.load %arg5[%c13_116, %c3_117] : memref<16x4xf32, #tpu.memory_space<smem>>
    %223 = vector.broadcast %222 : f32 to vector<8x8xf32>
    %224 = arith.select %38, %223, %221 : vector<8x8xi1>, vector<8x8xf32>
    %c14_118 = arith.constant 14 : index
    %c3_119 = arith.constant 3 : index
    %225 = memref.load %arg5[%c14_118, %c3_119] : memref<16x4xf32, #tpu.memory_space<smem>>
    %226 = vector.broadcast %225 : f32 to vector<8x8xf32>
    %227 = arith.select %40, %226, %224 : vector<8x8xi1>, vector<8x8xf32>
    %c15_120 = arith.constant 15 : index
    %c3_121 = arith.constant 3 : index
    %228 = memref.load %arg5[%c15_120, %c3_121] : memref<16x4xf32, #tpu.memory_space<smem>>
    %229 = vector.broadcast %228 : f32 to vector<8x8xf32>
    %230 = arith.select %42, %229, %227 : vector<8x8xi1>, vector<8x8xf32>
    %231 = vector.shape_cast %89 : vector<8x8xf32> to vector<1x8x8xf32>
    %232 = vector.shape_cast %136 : vector<8x8xf32> to vector<1x8x8xf32>
    %233 = vector.shape_cast %183 : vector<8x8xf32> to vector<1x8x8xf32>
    %234 = vector.shape_cast %230 : vector<8x8xf32> to vector<1x8x8xf32>
    %235 = tpu.concatenate %231, %232, %233, %234 in 0 : vector<1x8x8xf32>, vector<1x8x8xf32>, vector<1x8x8xf32>, vector<1x8x8xf32> -> vector<4x8x8xf32>
    %c0_122 = arith.constant 0 : index
    %c0_123 = arith.constant 0 : index
    %c0_124 = arith.constant 0 : index
    %236 = vector.load %arg3[%c0_122, %c0_123, %c0_124] : memref<1x8x1xf32, #tpu.memory_space<vmem>>, vector<1x8x1xf32>
    %237 = vector.shape_cast %236 : vector<1x8x1xf32> to vector<8x1xf32>
    %c0_125 = arith.constant 0 : index
    %c0_126 = arith.constant 0 : index
    %c0_127 = arith.constant 0 : index
    %238 = vector.load %arg2[%c0_125, %c0_126, %c0_127] : memref<1x1x8xf32, #tpu.memory_space<vmem>>, vector<1x1x8xf32>
    %239 = vector.shape_cast %238 : vector<1x1x8xf32> to vector<1x8xf32>
    %240 = vector.broadcast %237 : vector<8x1xf32> to vector<8x8xf32>
    %241 = vector.broadcast %239 : vector<1x8xf32> to vector<8x8xf32>
    %242 = arith.mulf %240, %241 : vector<8x8xf32>
    %cst_128 = arith.constant 5.000000e-01 : f32
    %243 = vector.broadcast %cst_128 : f32 to vector<8x8xf32>
    %244 = arith.cmpf ogt, %242, %243 : vector<8x8xf32>
    %245 = vector.shape_cast %244 : vector<8x8xi1> to vector<1x8x8xi1>
    %246 = arith.addf %10, %235 : vector<4x8x8xf32>
    %cst_129 = arith.constant -3.40282347E+38 : f32
    %247 = vector.shape_cast %245 : vector<1x8x8xi1> to vector<1x8x8xi1>
    %248 = vector.broadcast %247 : vector<1x8x8xi1> to vector<4x8x8xi1>
    %249 = vector.broadcast %cst_129 : f32 to vector<4x8x8xf32>
    %250 = arith.select %248, %246, %249 : vector<4x8x8xi1>, vector<4x8x8xf32>
    %cst_130 = arith.constant dense<0xFF800000> : vector<4x8xf32>
    %251 = vector.multi_reduction <maximumf>, %250, %cst_130 [2] : vector<4x8x8xf32> to vector<4x8xf32>
    %252 = vector.shape_cast %251 : vector<4x8xf32> to vector<4x8x1xf32>
    %253 = vector.broadcast %252 : vector<4x8x1xf32> to vector<4x8x8xf32>
    %254 = arith.subf %250, %253 : vector<4x8x8xf32>
    %255 = math.exp %254 : vector<4x8x8xf32>
    %cst_131 = arith.constant dense<0.000000e+00> : vector<4x8xf32>
    %256 = vector.multi_reduction <add>, %255, %cst_131 [2] : vector<4x8x8xf32> to vector<4x8xf32>
    %257 = vector.shape_cast %256 : vector<4x8xf32> to vector<4x8x1xf32>
    %258 = vector.broadcast %257 : vector<4x8x1xf32> to vector<4x8x8xf32>
    %259 = arith.divf %255, %258 : vector<4x8x8xf32>
    %cst_132 = arith.constant dense<0.000000e+00> : vector<4x8x16xf32>
    %260 = tpu.matmul %259, %9, %cst_132 {dimension_numbers = #tpu.dot_dimension_numbers<[2], [1], [1], [2], [0, 0, 0, 1, 1, 2], [0], [0]>} : vector<4x8x8xf32>, vector<4x8x16xf32>, vector<4x8x16xf32> -> vector<4x8x16xf32>
    %c0_133 = arith.constant 0 : index
    %c0_134 = arith.constant 0 : index
    %c0_135 = arith.constant 0 : index
    %261 = vector.load %arg7[%c0_133, %c0_134, %c0_135] : memref<4x16x32xf32, #tpu.memory_space<vmem>>, vector<4x16x32xf32>
    %cst_136 = arith.constant dense<0.000000e+00> : vector<4x8x32xf32>
    %262 = tpu.matmul %260, %261, %cst_136 {dimension_numbers = #tpu.dot_dimension_numbers<[2], [1], [1], [2], [0, 0, 0, 1, 1, 2], [0], [0]>} : vector<4x8x16xf32>, vector<4x16x32xf32>, vector<4x8x32xf32> -> vector<4x8x32xf32>
    %cst_137 = arith.constant dense<0.000000e+00> : vector<8x32xf32>
    %263 = vector.multi_reduction <add>, %262, %cst_137 [0] : vector<4x8x32xf32> to vector<8x32xf32>
    %c0_138 = arith.constant 0 : index
    %c0_139 = arith.constant 0 : index
    %264 = vector.load %arg8[%c0_138, %c0_139] : memref<1x32xf32, #tpu.memory_space<vmem>>, vector<1x32xf32>
    %265 = vector.broadcast %264 : vector<1x32xf32> to vector<8x32xf32>
    %266 = arith.addf %263, %265 : vector<8x32xf32>
    %c0_140 = arith.constant 0 : index
    %c0_141 = arith.constant 0 : index
    %c0_142 = arith.constant 0 : index
    %267 = vector.load %arg9[%c0_140, %c0_141, %c0_142] : memref<1x8x32xf32, #tpu.memory_space<vmem>>, vector<1x8x32xf32>
    %268 = vector.shape_cast %267 : vector<1x8x32xf32> to vector<8x32xf32>
    %269 = vector.shape_cast %266 : vector<8x32xf32> to vector<1x8x32xf32>
    tpu.vector_store %arg9[%c0_140, %c0_141, %c0_142], %269 {strides = array<i32>} : memref<1x8x32xf32, #tpu.memory_space<vmem>>, vector<1x8x32xf32>,
    return
  }
  func.func @transform_0(%arg0: i32) -> (i32, i32, i32) {
    %c0_i32 = arith.constant 0 : i32
    %c0_i32_0 = arith.constant 0 : i32
    %c0_i32_1 = arith.constant 0 : i32
    return %arg0, %c0_i32, %c0_i32_0 : i32, i32, i32
  }
  func.func @transform_1(%arg0: i32) -> (i32, i32, i32) {
    %c0_i32 = arith.constant 0 : i32
    %c0_i32_0 = arith.constant 0 : i32
    %c0_i32_1 = arith.constant 0 : i32
    return %arg0, %c0_i32, %c0_i32_0 : i32, i32, i32
  }
  func.func @transform_2(%arg0: i32) -> (i32, i32, i32) {
    %c0_i32 = arith.constant 0 : i32
    %c0_i32_0 = arith.constant 0 : i32
    %c0_i32_1 = arith.constant 0 : i32
    return %arg0, %c0_i32, %c0_i32_0 : i32, i32, i32
  }
  func.func @transform_3(%arg0: i32) -> (i32, i32, i32) {
    %c0_i32 = arith.constant 0 : i32
    %c0_i32_0 = arith.constant 0 : i32
    %c0_i32_1 = arith.constant 0 : i32
    return %arg0, %c0_i32, %c0_i32_0 : i32, i32, i32
  }
  func.func @transform_4(%arg0: i32) -> (i32, i32) {
    %c0_i32 = arith.constant 0 : i32
    %c0_i32_0 = arith.constant 0 : i32
    %c0_i32_1 = arith.constant 0 : i32
    return %c0_i32, %c0_i32_0 : i32, i32
  }
  func.func @transform_5(%arg0: i32) -> (i32, i32, i32) {
    %c0_i32 = arith.constant 0 : i32
    %c0_i32_0 = arith.constant 0 : i32
    %c0_i32_1 = arith.constant 0 : i32
    %c0_i32_2 = arith.constant 0 : i32
    return %c0_i32, %c0_i32_0, %c0_i32_1 : i32, i32, i32
  }
  func.func @transform_6(%arg0: i32) -> (i32, i32, i32) {
    %c0_i32 = arith.constant 0 : i32
    %c0_i32_0 = arith.constant 0 : i32
    %c0_i32_1 = arith.constant 0 : i32
    %c0_i32_2 = arith.constant 0 : i32
    return %c0_i32, %c0_i32_0, %c0_i32_1 : i32, i32, i32
  }
  func.func @transform_7(%arg0: i32) -> (i32, i32) {
    %c0_i32 = arith.constant 0 : i32
    %c0_i32_0 = arith.constant 0 : i32
    %c0_i32_1 = arith.constant 0 : i32
    return %c0_i32, %c0_i32_0 : i32, i32
  }
  func.func @transform_8(%arg0: i32) -> (i32, i32, i32) {
    %c0_i32 = arith.constant 0 : i32
    %c0_i32_0 = arith.constant 0 : i32
    %c0_i32_1 = arith.constant 0 : i32
    return %arg0, %c0_i32, %c0_i32_0 : i32, i32, i32
  }
}

module attributes {stable_mosaic.version = 11 : i64} {
  func.func @post_mlp_kernel(%arg0: i32, %arg1: memref<14x32xf32, #tpu.memory_space<vmem>>, %arg2: memref<14x32xf32, #tpu.memory_space<vmem>>, %arg3: memref<14x1xf32, #tpu.memory_space<vmem>>, %arg4: memref<32x32xf32, #tpu.memory_space<vmem>>, %arg5: memref<1x32xf32, #tpu.memory_space<vmem>>, %arg6: memref<1x1xf32, #tpu.memory_space<smem>>, %arg7: memref<32x32xf32, #tpu.memory_space<vmem>>, %arg8: memref<1x32xf32, #tpu.memory_space<vmem>>, %arg9: memref<14x32xf32, #tpu.memory_space<vmem>>) attributes {dimension_semantics = [#tpu.dimension_semantics<arbitrary>], iteration_bounds = array<i64: 1>, scalar_prefetch = 0 : i64, scratch_operands = 0 : i64, tpu.core_type = #tpu.core_type<tc>, window_params = [{pipeline_mode = #tpu.pipeline_mode<synchronous>, transform_indices = @transform_0, window_bounds = array<i64: 14, 32>}, {pipeline_mode = #tpu.pipeline_mode<synchronous>, transform_indices = @transform_1, window_bounds = array<i64: 14, 32>}, {pipeline_mode = #tpu.pipeline_mode<synchronous>, transform_indices = @transform_2, window_bounds = array<i64: 14, 1>}, {pipeline_mode = #tpu.pipeline_mode<synchronous>, transform_indices = @transform_3, window_bounds = array<i64: 32, 32>}, {pipeline_mode = #tpu.pipeline_mode<synchronous>, transform_indices = @transform_4, window_bounds = array<i64: 1, 32>}, {transform_indices = @transform_5, window_bounds = array<i64: 1, 1>}, {pipeline_mode = #tpu.pipeline_mode<synchronous>, transform_indices = @transform_6, window_bounds = array<i64: 32, 32>}, {pipeline_mode = #tpu.pipeline_mode<synchronous>, transform_indices = @transform_7, window_bounds = array<i64: 1, 32>}, {pipeline_mode = #tpu.pipeline_mode<synchronous>, transform_indices = @transform_8, window_bounds = array<i64: 14, 32>}]} {
    %c0 = arith.constant 0 : index
    %c0_0 = arith.constant 0 : index
    %0 = vector.load %arg1[%c0, %c0_0] : memref<14x32xf32, #tpu.memory_space<vmem>>, vector<14x32xf32>
    %c0_1 = arith.constant 0 : index
    %c0_2 = arith.constant 0 : index
    %1 = vector.load %arg2[%c0_1, %c0_2] : memref<14x32xf32, #tpu.memory_space<vmem>>, vector<14x32xf32>
    %c0_3 = arith.constant 0 : index
    %c0_4 = arith.constant 0 : index
    %2 = vector.load %arg3[%c0_3, %c0_4] : memref<14x1xf32, #tpu.memory_space<vmem>>, vector<14x1xf32>
    %3 = vector.broadcast %2 : vector<14x1xf32> to vector<14x32xf32>
    %4 = arith.mulf %1, %3 : vector<14x32xf32>
    %5 = arith.addf %0, %4 : vector<14x32xf32>
    %c0_5 = arith.constant 0 : index
    %c0_6 = arith.constant 0 : index
    %6 = vector.load %arg4[%c0_5, %c0_6] : memref<32x32xf32, #tpu.memory_space<vmem>>, vector<32x32xf32>
    %cst = arith.constant dense<0.000000e+00> : vector<14x32xf32>
    %7 = tpu.matmul %5, %6, %cst {dimension_numbers = #tpu.dot_dimension_numbers<[1], [0], [0], [1], [0, 0, 1, 1], [], []>} : vector<14x32xf32>, vector<32x32xf32>, vector<14x32xf32> -> vector<14x32xf32>
    %c0_7 = arith.constant 0 : index
    %c0_8 = arith.constant 0 : index
    %8 = vector.load %arg5[%c0_7, %c0_8] : memref<1x32xf32, #tpu.memory_space<vmem>>, vector<1x32xf32>
    %9 = vector.broadcast %8 : vector<1x32xf32> to vector<14x32xf32>
    %10 = arith.addf %7, %9 : vector<14x32xf32>
    %c0_9 = arith.constant 0 : index
    %c0_10 = arith.constant 0 : index
    %11 = memref.load %arg6[%c0_9, %c0_10] : memref<1x1xf32, #tpu.memory_space<smem>>
    %cst_11 = arith.constant 0.000000e+00 : f32
    %12 = vector.broadcast %cst_11 : f32 to vector<14x32xf32>
    %13 = arith.cmpf oge, %10, %12 : vector<14x32xf32>
    %14 = vector.broadcast %11 : f32 to vector<14x32xf32>
    %15 = arith.mulf %14, %10 : vector<14x32xf32>
    %16 = arith.select %13, %10, %15 : vector<14x32xi1>, vector<14x32xf32>
    %c0_12 = arith.constant 0 : index
    %c0_13 = arith.constant 0 : index
    %17 = vector.load %arg7[%c0_12, %c0_13] : memref<32x32xf32, #tpu.memory_space<vmem>>, vector<32x32xf32>
    %cst_14 = arith.constant dense<0.000000e+00> : vector<14x32xf32>
    %18 = tpu.matmul %16, %17, %cst_14 {dimension_numbers = #tpu.dot_dimension_numbers<[1], [0], [0], [1], [0, 0, 1, 1], [], []>} : vector<14x32xf32>, vector<32x32xf32>, vector<14x32xf32> -> vector<14x32xf32>
    %c0_15 = arith.constant 0 : index
    %c0_16 = arith.constant 0 : index
    %19 = vector.load %arg8[%c0_15, %c0_16] : memref<1x32xf32, #tpu.memory_space<vmem>>, vector<1x32xf32>
    %20 = vector.broadcast %19 : vector<1x32xf32> to vector<14x32xf32>
    %21 = arith.addf %18, %20 : vector<14x32xf32>
    %c0_17 = arith.constant 0 : index
    %c0_18 = arith.constant 0 : index
    %22 = vector.load %arg9[%c0_17, %c0_18] : memref<14x32xf32, #tpu.memory_space<vmem>>, vector<14x32xf32>
    tpu.vector_store %arg9[%c0_17, %c0_18], %21 {strides = array<i32>} : memref<14x32xf32, #tpu.memory_space<vmem>>, vector<14x32xf32>,
    return
  }
  func.func @transform_0(%arg0: i32) -> (i32, i32) {
    %c0_i32 = arith.constant 0 : i32
    %c0_i32_0 = arith.constant 0 : i32
    %c0_i32_1 = arith.constant 0 : i32
    return %c0_i32, %c0_i32_0 : i32, i32
  }
  func.func @transform_1(%arg0: i32) -> (i32, i32) {
    %c0_i32 = arith.constant 0 : i32
    %c0_i32_0 = arith.constant 0 : i32
    %c0_i32_1 = arith.constant 0 : i32
    return %c0_i32, %c0_i32_0 : i32, i32
  }
  func.func @transform_2(%arg0: i32) -> (i32, i32) {
    %c0_i32 = arith.constant 0 : i32
    %c0_i32_0 = arith.constant 0 : i32
    %c0_i32_1 = arith.constant 0 : i32
    return %c0_i32, %c0_i32_0 : i32, i32
  }
  func.func @transform_3(%arg0: i32) -> (i32, i32) {
    %c0_i32 = arith.constant 0 : i32
    %c0_i32_0 = arith.constant 0 : i32
    %c0_i32_1 = arith.constant 0 : i32
    return %c0_i32, %c0_i32_0 : i32, i32
  }
  func.func @transform_4(%arg0: i32) -> (i32, i32) {
    %c0_i32 = arith.constant 0 : i32
    %c0_i32_0 = arith.constant 0 : i32
    %c0_i32_1 = arith.constant 0 : i32
    return %c0_i32, %c0_i32_0 : i32, i32
  }
  func.func @transform_5(%arg0: i32) -> (i32, i32) {
    %c0_i32 = arith.constant 0 : i32
    %c0_i32_0 = arith.constant 0 : i32
    %c0_i32_1 = arith.constant 0 : i32
    return %c0_i32, %c0_i32_0 : i32, i32
  }
  func.func @transform_6(%arg0: i32) -> (i32, i32) {
    %c0_i32 = arith.constant 0 : i32
    %c0_i32_0 = arith.constant 0 : i32
    %c0_i32_1 = arith.constant 0 : i32
    return %c0_i32, %c0_i32_0 : i32, i32
  }
  func.func @transform_7(%arg0: i32) -> (i32, i32) {
    %c0_i32 = arith.constant 0 : i32
    %c0_i32_0 = arith.constant 0 : i32
    %c0_i32_1 = arith.constant 0 : i32
    return %c0_i32, %c0_i32_0 : i32, i32
  }
  func.func @transform_8(%arg0: i32) -> (i32, i32) {
    %c0_i32 = arith.constant 0 : i32
    %c0_i32_0 = arith.constant 0 : i32
    %c0_i32_1 = arith.constant 0 : i32
    return %c0_i32, %c0_i32_0 : i32, i32
  }
}

</mosaic_0001>

<llo_original>
// kernel: graphormer_layer_forward.3
$region0: #{graphormer_layer_forward.3}
  #allocation0 [shape = 'u32[]', space=smem, size = 0x4, offset = 0x4, fixed_abs, tag = 'smem constant byte address 0x4 - core index']
  #allocation1 [shape = 'u32[144,128]{1,0:T(1,128)}', space=vmem, size = 0x12000, scoped, tag = 'internal scratch']
  #allocation2 [shape = 'f32[1,1]{1,0:T(1,128)S(6)}', space=smem, size = 0x200, scoped, tag = 'scoped memory for graphormer_layer_forward.3']
  %s0 = inlined_call_operand.vmem [shape: f32[14,32], index: 0, kind: input, shape index: {}]
  %s1 = inlined_call_operand.vmem [shape: f32[14,32], index: 1, kind: input, shape index: {}]
  %s2 = inlined_call_operand.vmem [shape: f32[14,1], index: 2, kind: input, shape index: {}]
  %s3 = inlined_call_operand.vmem [shape: f32[32,32], index: 3, kind: input, shape index: {}]
  %s4 = inlined_call_operand.vmem [shape: f32[1,32], index: 4, kind: input, shape index: {}]
  %s5 = inlined_call_operand.<no memory space> [shape: f32[1,1], index: 5, kind: input, shape index: {}]
  %s6 = inlined_call_operand.vmem [shape: f32[32,32], index: 6, kind: input, shape index: {}]
  %s7 = inlined_call_operand.vmem [shape: f32[1,32], index: 7, kind: input, shape index: {}]
  %s8 = inlined_call_operand.hbm [shape: f32[14,32], index: 8, kind: output, shape index: {}]
  %s9 = sld [smem:[#allocation0]]
  $region42: #{graphormer_layer_forward.3} parent=0
    _
  %s11 = ssub.s32 1, %s9
  %s12 = scalar_select 0, %s11, %s9
  %13 = sst [smem:[#allocation2]] %s5
  $region1: #{graphormer_layer_forward.3} parent=0
    #allocation3 [shape = 'u8[8192]{0}', space=vmem, size = 0x2000, scoped, tag = 'output window, operand 0, single buffered']
    #allocation4 [shape = 's32[1]{0}', space=sflag, size = 0x4, scoped, tag = 'scoped memory for graphormer_layer_forward.3']
    %14 = vsyncpa [#allocation4], 0
    // Predicated region
    $region2: #{graphormer_layer_forward.3} parent=1 // pred_check
      _
    $region3: #{graphormer_layer_forward.3} parent=1 // pred_check_branch
      %16 = sbr.rel (0) target = $region5
    $region4: #{graphormer_layer_forward.3} parent=1 // pred_region
      _
    $region5: #{graphormer_layer_forward.3} parent=1 // pred_fallthru
      _
    // Predicated region
    $region6: #{graphormer_layer_forward.3} parent=1 // pred_check
      _
    $region7: #{graphormer_layer_forward.3} parent=1 // pred_check_branch
      %18 = sbr.rel (0) target = $region9
    $region8: #{graphormer_layer_forward.3} parent=1 // pred_region
      _
    $region9: #{graphormer_layer_forward.3} parent=1 // pred_fallthru
      _
    // Predicated region
    $region10: #{graphormer_layer_forward.3} parent=1 // pred_check
      _
    $region11: #{graphormer_layer_forward.3} parent=1 // pred_check_branch
      %20 = sbr.rel (0) target = $region13
    $region12: #{graphormer_layer_forward.3} parent=1 // pred_region
      _
    $region13: #{graphormer_layer_forward.3} parent=1 // pred_fallthru
      _
    // Predicated region
    $region14: #{graphormer_layer_forward.3} parent=1 // pred_check
      _
    $region15: #{graphormer_layer_forward.3} parent=1 // pred_check_branch
      %22 = sbr.rel (0) target = $region17
    $region16: #{graphormer_layer_forward.3} parent=1 // pred_region
      _
    $region17: #{graphormer_layer_forward.3} parent=1 // pred_fallthru
      _
    // Predicated region
    $region18: #{graphormer_layer_forward.3} parent=1 // pred_check
      _
    $region19: #{graphormer_layer_forward.3} parent=1 // pred_check_branch
      %24 = sbr.rel (0) target = $region21
    $region20: #{graphormer_layer_forward.3} parent=1 // pred_region
      _
    $region21: #{graphormer_layer_forward.3} parent=1 // pred_fallthru
      _
    // Predicated region
    $region22: #{graphormer_layer_forward.3} parent=1 // pred_check
      _
    $region23: #{graphormer_layer_forward.3} parent=1 // pred_check_branch
      %26 = sbr.rel (0) target = $region25
    $region24: #{graphormer_layer_forward.3} parent=1 // pred_region
      _
    $region25: #{graphormer_layer_forward.3} parent=1 // pred_fallthru
      _
    // Predicated region
    $region26: #{graphormer_layer_forward.3} parent=1 // pred_check
      _
    $region27: #{graphormer_layer_forward.3} parent=1 // pred_check_branch
      %28 = sbr.rel (0) target = $region29
    $region28: #{graphormer_layer_forward.3} parent=1 // pred_region
      _
    $region29: #{graphormer_layer_forward.3} parent=1 // pred_fallthru
      _
    // Predicated region
    $region30: #{graphormer_layer_forward.3} parent=1 // pred_check
      _
    $region31: #{graphormer_layer_forward.3} parent=1 // pred_check_branch
      %30 = sbr.rel (0) target = $region33
    $region32: #{graphormer_layer_forward.3} parent=1 // pred_region
      _
    $region33: #{graphormer_layer_forward.3} parent=1 // pred_fallthru
      _
    %v31 = vld [vmem:[%s0] sm:$0xff]
    %v32 = vld [vmem:[%s0 + $0x8] sm:$0x3f]
    %v33 = vld [vmem:[%s1] sm:$0xff]
    %v34 = vld [vmem:[%s1 + $0x8] sm:$0x3f]
    %v35 = vld [vmem:[%s2] sm:$0xff]
    %v36 = vld [vmem:[%s2 + $0x8] sm:$0x3f]
    %38 = vset.pattern.permute.xlu0 0
    %39 = vperm.xlu0 %38, %v35
    %v40 = vpop.permute.xlu0 %39
    %43 = vset.pattern.permute.xlu0 0
    %44 = vperm.xlu0 %43, %v36
    %v45 = vpop.permute.xlu0 %44
    %v47 = vmul.f32 %v33, %v40
    %v48 = vmul.f32 %v34, %v45
    %v49 = vadd.f32 %v31, %v47
    %v50 = vadd.f32 %v32, %v48
    %v51 = vld [vmem:[%s3] sm:$0xff]
    %v52 = vld [vmem:[%s3 + $0x8] sm:$0xff]
    %v53 = vld [vmem:[%s3 + $0x10] sm:$0xff]
    %v54 = vld [vmem:[%s3 + $0x18] sm:$0xff]
    %v55 = vld [vmem:[%s4] sm:$0x1]
    %v57 = vlaneseq
    %v58 = vshrl.u32 %v57, 7
    %v59 = vsub.s32 0, %v58
    %v60 = vrot.slane %v55, %v59
    %vm62 = vcmask 261120
    %v64 = vsel %vm62, %v49, 0
    %v67 = vsel %vm62, %v50, 0
    %69 = vmatprep.subr.mxu0 0.0
    %70 = vmatpush1.msra.mxu0 0.0
    %71 = vmatprep.subr.mxu0 0.0
    %72 = vmatpush1.msra.mxu0 0.0
    %73 = vmatprep.subr.mxu0 0.0
    %74 = vmatpush1.msra.mxu0 0.0
    %75 = vmatprep.subr.mxu0 0.0
    %76 = vmatpush1.msra.mxu0 0.0
    %77 = vmatprep.subr.mxu0 0.0
    %78 = vmatpush1.msra.mxu0 0.0
    %79 = vmatprep.subr.mxu0 0.0
    %80 = vmatpush1.msra.mxu0 0.0
    %81 = vmatprep.subr.mxu0 0.0
    %82 = vmatpush1.msra.mxu0 0.0
    %83 = vmatprep.subr.mxu0 0.0
    %84 = vmatpush1.msra.mxu0 0.0
    %85 = vmatprep.subr.mxu0 0.0
    %86 = vmatpush1.msra.mxu0 0.0
    %87 = vmatprep.subr.mxu0 0.0
    %88 = vmatpush1.msra.mxu0 0.0
    %89 = vmatprep.subr.mxu0 0.0
    %90 = vmatpush1.msra.mxu0 0.0
    %91 = vmatprep.subr.mxu0 0.0
    %92 = vmatpush1.msra.mxu0 0.0
    %93 = vmatprep.subr.mxu0 0.0
    %94 = vmatpush1.msra.mxu0 %v54
    %95 = vmatprep.subr.mxu0 0.0
    %96 = vmatpush1.msra.mxu0 %v53
    %97 = vmatprep.subr.mxu0 0.0
    %98 = vmatpush1.msra.mxu0 %v52
    %99 = vmatprep.subr.mxu0 0.0
    %100 = vmatpush1.msra.mxu0 %v51
    %101 = vmatprep.subr.mxu0 0.0
    %102 = vmatpush2.msra.mxu0 0.0
    %103 = vmatprep.subr.mxu0 0.0
    %104 = vmatpush2.msra.mxu0 0.0
    %105 = vmatprep.subr.mxu0 0.0
    %106 = vmatpush2.msra.mxu0 0.0
    %107 = vmatprep.subr.mxu0 0.0
    %108 = vmatpush2.msra.mxu0 0.0
    %109 = vmatprep.subr.mxu0 0.0
    %110 = vmatpush2.msra.mxu0 0.0
    %111 = vmatprep.subr.mxu0 0.0
    %112 = vmatpush2.msra.mxu0 0.0
    %113 = vmatprep.subr.mxu0 0.0
    %114 = vmatpush2.msra.mxu0 0.0
    %115 = vmatprep.subr.mxu0 0.0
    %116 = vmatpush2.msra.mxu0 0.0
    %117 = vmatprep.subr.mxu0 0.0
    %118 = vmatpush2.msra.mxu0 0.0
    %119 = vmatprep.subr.mxu0 0.0
    %120 = vmatpush2.msra.mxu0 0.0
    %121 = vmatprep.subr.mxu0 0.0
    %122 = vmatpush2.msra.mxu0 0.0
    %123 = vmatprep.subr.mxu0 0.0
    %124 = vmatpush2.msra.mxu0 0.0
    %125 = vmatprep.subr.mxu0 0.0
    %126 = vmatpush2.msra.mxu0 0.0
    %127 = vmatprep.subr.mxu0 0.0
    %128 = vmatpush2.msra.mxu0 0.0
    %129 = vmatprep.subr.mxu0 0.0
    %130 = vmatpush2.msra.mxu0 0.0
    %131 = vmatprep.subr.mxu0 0.0
    %132 = vmatpush2.msra.mxu0 0.0
    %133 = vmatprep.mubr.f32.mxu0 0.0
    %134 = vmatmul.mubr.f32.gmra.mxu0 %v64
    %v135 = vpop.f32.mrf.mxu0
    %v136 = vadd.f32 %v60, %v135
    %v137 = vpop.f32.mrf.mxu0
    %138 = vmatprep.mubr.f32.mxu0 0.0
    %139 = vmatmul.mubr.f32.gmra.mxu0 %v67
    %v140 = vpop.f32.mrf.mxu0
    %v141 = vadd.f32 %v60, %v140
    %v142 = vpop.f32.mrf.mxu0
    %143 = vdwg.mxu0
    %s144 = sld [smem:[#allocation2]]
    %vm145 = vcmp.ge.f32.partialorder %v136, 0.0
    %vm146 = vcmp.ge.f32.partialorder %v141, 0.0
    %v147 = vstv %s144
    %v148 = vmul.f32 %v147, %v136
    %v149 = vmul.f32 %v147, %v141
    %v150 = vsel %vm145, %v136, %v148
    %v151 = vsel %vm146, %v141, %v149
    %v152 = vld [vmem:[%s6] sm:$0xff]
    %v153 = vld [vmem:[%s6 + $0x8] sm:$0xff]
    %v154 = vld [vmem:[%s6 + $0x10] sm:$0xff]
    %v155 = vld [vmem:[%s6 + $0x18] sm:$0xff]
    %v156 = vld [vmem:[%s7] sm:$0x1]
    %v158 = vlaneseq
    %v159 = vshrl.u32 %v158, 7
    %v160 = vsub.s32 0, %v159
    %v161 = vrot.slane %v156, %v160
    %v164 = vsel %vm62, %v150, 0
    %v167 = vsel %vm62, %v151, 0
    %169 = vmatprep.subr.mxu0 0.0
    %170 = vmatpush1.msra.mxu0 0.0
    %171 = vmatprep.subr.mxu0 0.0
    %172 = vmatpush1.msra.mxu0 0.0
    %173 = vmatprep.subr.mxu0 0.0
    %174 = vmatpush1.msra.mxu0 0.0
    %175 = vmatprep.subr.mxu0 0.0
    %176 = vmatpush1.msra.mxu0 0.0
    %177 = vmatprep.subr.mxu0 0.0
    %178 = vmatpush1.msra.mxu0 0.0
    %179 = vmatprep.subr.mxu0 0.0
    %180 = vmatpush1.msra.mxu0 0.0
    %181 = vmatprep.subr.mxu0 0.0
    %182 = vmatpush1.msra.mxu0 0.0
    %183 = vmatprep.subr.mxu0 0.0
    %184 = vmatpush1.msra.mxu0 0.0
    %185 = vmatprep.subr.mxu0 0.0
    %186 = vmatpush1.msra.mxu0 0.0
    %187 = vmatprep.subr.mxu0 0.0
    %188 = vmatpush1.msra.mxu0 0.0
    %189 = vmatprep.subr.mxu0 0.0
    %190 = vmatpush1.msra.mxu0 0.0
    %191 = vmatprep.subr.mxu0 0.0
    %192 = vmatpush1.msra.mxu0 0.0
    %193 = vmatprep.subr.mxu0 0.0
    %194 = vmatpush1.msra.mxu0 %v155
    %195 = vmatprep.subr.mxu0 0.0
    %196 = vmatpush1.msra.mxu0 %v154
    %197 = vmatprep.subr.mxu0 0.0
    %198 = vmatpush1.msra.mxu0 %v153
    %199 = vmatprep.subr.mxu0 0.0
    %200 = vmatpush1.msra.mxu0 %v152
    %201 = vmatprep.subr.mxu0 0.0
    %202 = vmatpush2.msra.mxu0 0.0
    %203 = vmatprep.subr.mxu0 0.0
    %204 = vmatpush2.msra.mxu0 0.0
    %205 = vmatprep.subr.mxu0 0.0
    %206 = vmatpush2.msra.mxu0 0.0
    %207 = vmatprep.subr.mxu0 0.0
    %208 = vmatpush2.msra.mxu0 0.0
    %209 = vmatprep.subr.mxu0 0.0
    %210 = vmatpush2.msra.mxu0 0.0
    %211 = vmatprep.subr.mxu0 0.0
    %212 = vmatpush2.msra.mxu0 0.0
    %213 = vmatprep.subr.mxu0 0.0
    %214 = vmatpush2.msra.mxu0 0.0
    %215 = vmatprep.subr.mxu0 0.0
    %216 = vmatpush2.msra.mxu0 0.0
    %217 = vmatprep.subr.mxu0 0.0
    %218 = vmatpush2.msra.mxu0 0.0
    %219 = vmatprep.subr.mxu0 0.0
    %220 = vmatpush2.msra.mxu0 0.0
    %221 = vmatprep.subr.mxu0 0.0
    %222 = vmatpush2.msra.mxu0 0.0
    %223 = vmatprep.subr.mxu0 0.0
    %224 = vmatpush2.msra.mxu0 0.0
    %225 = vmatprep.subr.mxu0 0.0
    %226 = vmatpush2.msra.mxu0 0.0
    %227 = vmatprep.subr.mxu0 0.0
    %228 = vmatpush2.msra.mxu0 0.0
    %229 = vmatprep.subr.mxu0 0.0
    %230 = vmatpush2.msra.mxu0 0.0
    %231 = vmatprep.subr.mxu0 0.0
    %232 = vmatpush2.msra.mxu0 0.0
    %233 = vmatprep.mubr.f32.mxu0 0.0
    %234 = vmatmul.mubr.f32.gmra.mxu0 %v164
    %v235 = vpop.f32.mrf.mxu0
    %v236 = vadd.f32 %v161, %v235
    %v237 = vpop.f32.mrf.mxu0
    %238 = vmatprep.mubr.f32.mxu0 0.0
    %239 = vmatmul.mubr.f32.gmra.mxu0 %v167
    %v240 = vpop.f32.mrf.mxu0
    %v241 = vadd.f32 %v161, %v240
    %v242 = vpop.f32.mrf.mxu0
    %243 = vdwg.mxu0
    %244 = vst.msk [vmem:[#allocation3] sm:$0xff] %vm62, %v236
    %vm245 = vcmask 259072
    %246 = vst.msk [vmem:[#allocation3 + $0x8] sm:$0x3f] %vm245, %v241
    // Predicated region
    $region34: #{graphormer_layer_forward.3} parent=1 // pred_check
      _
    $region35: #{graphormer_layer_forward.3} parent=1 // pred_check_branch
      %248 = sbr.rel (0) target = $region37
    $region36: #{graphormer_layer_forward.3} parent=1 // pred_region
      %s250 = ssub.s32 256, 256
      %251 = vsyncadd [#allocation4], %s250
      %s252 = sshll.u32 [#allocation3], 4
      %s253 = int_to_ptr.vmem [resolvable:$true] %s252
      %258 = dma.vmem_to_hbm [thread:$0]  %s253, 256, %s8, [#allocation4], 128, 128, 8
    $region37: #{graphormer_layer_forward.3} parent=1 // pred_fallthru
      _
    // Predicated region
    $region38: #{graphormer_layer_forward.3} parent=1 // pred_check
      _
    $region39: #{graphormer_layer_forward.3} parent=1 // pred_check_branch
      %260 = sbr.rel (0) target = $region41
    $region40: #{graphormer_layer_forward.3} parent=1 // pred_region
      %261 = dma.done [#allocation4], 256
    $region41: #{graphormer_layer_forward.3} parent=1 // pred_fallthru
      _
    %262 = vsyncpa [#allocation4], 1

// kernel: graphormer_layer_forward.2
$region0: #{graphormer_layer_forward.2}
  #allocation0 [shape = 'u32[]', space=smem, size = 0x4, offset = 0x4, fixed_abs, tag = 'smem constant byte address 0x4 - core index']
  #allocation1 [shape = 'u32[144,128]{1,0:T(1,128)}', space=vmem, size = 0x12000, scoped, tag = 'internal scratch']
  %s0 = inlined_call_operand.vmem [shape: f32[2,8,32], index: 0, kind: input, shape index: {}]
  %s1 = inlined_call_operand.vmem [shape: f32[2,1,8], index: 1, kind: input, shape index: {}]
  %s2 = inlined_call_operand.vmem [shape: f32[2,8,1], index: 2, kind: input, shape index: {}]
  %s3 = inlined_call_operand.vmem [shape: s32[2,8,8], index: 3, kind: input, shape index: {}]
  %s4 = inlined_call_operand.vmem [shape: f32[16,4], index: 4, kind: input, shape index: {}]
  %s5 = inlined_call_operand.vmem [shape: f32[4,32,48], index: 5, kind: input, shape index: {}]
  %s6 = inlined_call_operand.vmem [shape: f32[4,16,32], index: 6, kind: input, shape index: {}]
  %s7 = inlined_call_operand.vmem [shape: f32[1,32], index: 7, kind: input, shape index: {}]
  %s8 = inlined_call_operand.vmem [shape: f32[2,8,32], index: 8, kind: output, shape index: {}]
  %s9 = sld [smem:[#allocation0]]
  $region69: #{graphormer_layer_forward.2} parent=0
    _
  %s11 = ssub.s32 1, %s9
  %s12 = scalar_select 0, %s11, %s9
  $region1: #{graphormer_layer_forward.2} parent=0
    #allocation2 [shape = 'u8[8192]{0}', space=smem, size = 0x2000, scoped, tag = 'input window, operand 4, single buffered']
    #allocation3 [shape = 's32[2]{0}', space=sflag, size = 0x8, scoped, tag = 'scoped memory for graphormer_layer_forward.2']
    %13 = vsyncpa [#allocation3], 0
    loop: start=0, step=1, limit=4
    $region2: #{graphormer_layer_forward.2} parent=1 // loop_pre_header
      _
    $region3: #{graphormer_layer_forward.2} parent=1 // loop_header
      %s15 = sphi 0, %s19
      %p16 = scmp.ge.s32.totalorder %s15, 4
      %s25 = sphi 0, %s27
      %s28 = sphi 0, %s25
      %s29 = sphi 0, %s28
      %s45 = sphi 0, %s29
      %s51 = sphi 0, %s53
      %s54 = sphi 0, %s51
      %s55 = sphi 0, %s54
      %s71 = sphi 0, %s55
      %s77 = sphi 0, %s79
      %s80 = sphi 0, %s77
      %s81 = sphi 0, %s80
      %s97 = sphi 0, %s81
      %s103 = sphi 0, %s105
      %s106 = sphi 0, %s103
      %s107 = sphi 0, %s106
      %s123 = sphi 0, %s107
      %s127 = sphi 0, %s127
      %s129 = sphi 0, %s127
      %s130 = sphi 0, %s129
      %s144 = sphi 0, %s130
      %s148 = sphi 0, %s148
      %s150 = sphi 0, %s148
      %s151 = sphi 0, %s150
      %s165 = sphi 0, %s151
      %s169 = sphi 0, %s169
      %s171 = sphi 0, %s169
      %s172 = sphi 0, %s171
      %s186 = sphi 0, %s172
      %s190 = sphi 0, %s190
      %s192 = sphi 0, %s190
      %s193 = sphi 0, %s192
      %s207 = sphi 0, %s193
      %s213 = sphi 0, %s215
      %s216 = sphi 0, %s213
      %s217 = sphi 0, %s216
      %s233 = sphi 0, %s217
    $region4: #{graphormer_layer_forward.2} parent=1 // loop_header_branch
      %18 = sbr.rel (%p16) target = $region8
    $region5: #{graphormer_layer_forward.2} parent=1 // loop_body
      %s20 = ssub.s32 %s15, 1
      %s21 = ssub.s32 %s15, 2
      %s22 = sadd.s32 %s15, 1
      %s23 = ssub.s32 %s15, %s22
      %p24 = scmp.eq.s32.totalorder %s23, 0
      %s26 = sadd.s32 %s25, 1
      %s27 = scalar_select %p24, %s25, %s26
      %p30 = pneg %p24
      %p31 = scmp.eq.s32.totalorder %s15, 1
      %p32 = por %p30, %p31
      %p33 = scmp.ne.s32.totalorder %s25, %s28
      %p34 = scmp.eq.s32.totalorder %s15, 0
      %p35 = por %p33, %p34
      %p36 = scmp.ne.s32.totalorder %s25, %s28
      %p37 = scmp.eq.s32.totalorder %s20, 1
      %p38 = por %p36, %p37
      %p39 = scmp.ne.s32.totalorder %s28, %s29
      %p40 = scmp.eq.s32.totalorder %s20, 0
      %p41 = por %p39, %p40
      %p42 = scmp.ne.s32.totalorder %s28, %s29
      %p43 = scmp.eq.s32.totalorder %s21, 1
      %p44 = por %p42, %p43
      %p46 = scmp.ne.s32.totalorder %s29, %s45
      %p47 = scmp.eq.s32.totalorder %s21, 0
      %p48 = por %p46, %p47
      %s49 = ssub.s32 %s15, %s22
      %p50 = scmp.eq.s32.totalorder %s49, 0
      %s52 = sadd.s32 %s51, 1
      %s53 = scalar_select %p50, %s51, %s52
      %p56 = pneg %p50
      %p57 = scmp.eq.s32.totalorder %s15, 1
      %p58 = por %p56, %p57
      %p59 = scmp.ne.s32.totalorder %s51, %s54
      %p60 = scmp.eq.s32.totalorder %s15, 0
      %p61 = por %p59, %p60
      %p62 = scmp.ne.s32.totalorder %s51, %s54
      %p63 = scmp.eq.s32.totalorder %s20, 1
      %p64 = por %p62, %p63
      %p65 = scmp.ne.s32.totalorder %s54, %s55
      %p66 = scmp.eq.s32.totalorder %s20, 0
      %p67 = por %p65, %p66
      %p68 = scmp.ne.s32.totalorder %s54, %s55
      %p69 = scmp.eq.s32.totalorder %s21, 1
      %p70 = por %p68, %p69
      %p72 = scmp.ne.s32.totalorder %s55, %s71
      %p73 = scmp.eq.s32.totalorder %s21, 0
      %p74 = por %p72, %p73
      %s75 = ssub.s32 %s15, %s22
      %p76 = scmp.eq.s32.totalorder %s75, 0
      %s78 = sadd.s32 %s77, 1
      %s79 = scalar_select %p76, %s77, %s78
      %p82 = pneg %p76
      %p83 = scmp.eq.s32.totalorder %s15, 1
      %p84 = por %p82, %p83
      %p85 = scmp.ne.s32.totalorder %s77, %s80
      %p86 = scmp.eq.s32.totalorder %s15, 0
      %p87 = por %p85, %p86
      %p88 = scmp.ne.s32.totalorder %s77, %s80
      %p89 = scmp.eq.s32.totalorder %s20, 1
      %p90 = por %p88, %p89
      %p91 = scmp.ne.s32.totalorder %s80, %s81
      %p92 = scmp.eq.s32.totalorder %s20, 0
      %p93 = por %p91, %p92
      %p94 = scmp.ne.s32.totalorder %s80, %s81
      %p95 = scmp.eq.s32.totalorder %s21, 1
      %p96 = por %p94, %p95
      %p98 = scmp.ne.s32.totalorder %s81, %s97
      %p99 = scmp.eq.s32.totalorder %s21, 0
      %p100 = por %p98, %p99
      %s101 = ssub.s32 %s15, %s22
      %p102 = scmp.eq.s32.totalorder %s101, 0
      %s104 = sadd.s32 %s103, 1
      %s105 = scalar_select %p102, %s103, %s104
      %p108 = pneg %p102
      %p109 = scmp.eq.s32.totalorder %s15, 1
      %p110 = por %p108, %p109
      %p111 = scmp.ne.s32.totalorder %s103, %s106
      %p112 = scmp.eq.s32.totalorder %s15, 0
      %p113 = por %p111, %p112
      %p114 = scmp.ne.s32.totalorder %s103, %s106
      %p115 = scmp.eq.s32.totalorder %s20, 1
      %p116 = por %p114, %p115
      %p117 = scmp.ne.s32.totalorder %s106, %s107
      %p118 = scmp.eq.s32.totalorder %s20, 0
      %p119 = por %p117, %p118
      %p120 = scmp.ne.s32.totalorder %s106, %s107
      %p121 = scmp.eq.s32.totalorder %s21, 1
      %p122 = por %p120, %p121
      %p124 = scmp.ne.s32.totalorder %s107, %s123
      %p125 = scmp.eq.s32.totalorder %s21, 0
      %p126 = por %p124, %p125
      %s128 = sadd.s32 %s127, 1
      %p131 = scmp.eq.s32.totalorder %s15, 1
      %p132 = scmp.ne.s32.totalorder %s127, %s129
      %p133 = scmp.eq.s32.totalorder %s15, 0
      %p134 = por %p132, %p133
      %p135 = scmp.ne.s32.totalorder %s127, %s129
      %p136 = scmp.eq.s32.totalorder %s20, 1
      %p137 = por %p135, %p136
      %p138 = scmp.ne.s32.totalorder %s129, %s130
      %p139 = scmp.eq.s32.totalorder %s20, 0
      %p140 = por %p138, %p139
      %p141 = scmp.ne.s32.totalorder %s129, %s130
      %p142 = scmp.eq.s32.totalorder %s21, 1
      %p143 = por %p141, %p142
      %p145 = scmp.ne.s32.totalorder %s130, %s144
      %p146 = scmp.eq.s32.totalorder %s21, 0
      %p147 = por %p145, %p146
      %s149 = sadd.s32 %s148, 1
      %p152 = scmp.eq.s32.totalorder %s15, 1
      %p153 = scmp.ne.s32.totalorder %s148, %s150
      %p154 = scmp.eq.s32.totalorder %s15, 0
      %p155 = por %p153, %p154
      %p156 = scmp.ne.s32.totalorder %s148, %s150
      %p157 = scmp.eq.s32.totalorder %s20, 1
      %p158 = por %p156, %p157
      %p159 = scmp.ne.s32.totalorder %s150, %s151
      %p160 = scmp.eq.s32.totalorder %s20, 0
      %p161 = por %p159, %p160
      %p162 = scmp.ne.s32.totalorder %s150, %s151
      %p163 = scmp.eq.s32.totalorder %s21, 1
      %p164 = por %p162, %p163
      %p166 = scmp.ne.s32.totalorder %s151, %s165
      %p167 = scmp.eq.s32.totalorder %s21, 0
      %p168 = por %p166, %p167
      %s170 = sadd.s32 %s169, 1
      %p173 = scmp.eq.s32.totalorder %s15, 1
      %p174 = scmp.ne.s32.totalorder %s169, %s171
      %p175 = scmp.eq.s32.totalorder %s15, 0
      %p176 = por %p174, %p175
      %p177 = scmp.ne.s32.totalorder %s169, %s171
      %p178 = scmp.eq.s32.totalorder %s20, 1
      %p179 = por %p177, %p178
      %p180 = scmp.ne.s32.totalorder %s171, %s172
      %p181 = scmp.eq.s32.totalorder %s20, 0
      %p182 = por %p180, %p181
      %p183 = scmp.ne.s32.totalorder %s171, %s172
      %p184 = scmp.eq.s32.totalorder %s21, 1
      %p185 = por %p183, %p184
      %p187 = scmp.ne.s32.totalorder %s172, %s186
      %p188 = scmp.eq.s32.totalorder %s21, 0
      %p189 = por %p187, %p188
      %s191 = sadd.s32 %s190, 1
      %p194 = scmp.eq.s32.totalorder %s15, 1
      %p195 = scmp.ne.s32.totalorder %s190, %s192
      %p196 = scmp.eq.s32.totalorder %s15, 0
      %p197 = por %p195, %p196
      %p198 = scmp.ne.s32.totalorder %s190, %s192
      %p199 = scmp.eq.s32.totalorder %s20, 1
      %p200 = por %p198, %p199
      %p201 = scmp.ne.s32.totalorder %s192, %s193
      %p202 = scmp.eq.s32.totalorder %s20, 0
      %p203 = por %p201, %p202
      %p204 = scmp.ne.s32.totalorder %s192, %s193
      %p205 = scmp.eq.s32.totalorder %s21, 1
      %p206 = por %p204, %p205
      %p208 = scmp.ne.s32.totalorder %s193, %s207
      %p209 = scmp.eq.s32.totalorder %s21, 0
      %p210 = por %p208, %p209
      %s211 = ssub.s32 %s15, %s22
      %p212 = scmp.eq.s32.totalorder %s211, 0
      %s214 = sadd.s32 %s213, 1
      %s215 = scalar_select %p212, %s213, %s214
      %p218 = pneg %p212
      %p219 = scmp.eq.s32.totalorder %s15, 1
      %p220 = por %p218, %p219
      %p221 = scmp.ne.s32.totalorder %s213, %s216
      %p222 = scmp.eq.s32.totalorder %s15, 0
      %p223 = por %p221, %p222
      %p224 = scmp.ne.s32.totalorder %s213, %s216
      %p225 = scmp.eq.s32.totalorder %s20, 1
      %p226 = por %p224, %p225
      %p227 = scmp.ne.s32.totalorder %s216, %s217
      %p228 = scmp.eq.s32.totalorder %s20, 0
      %p229 = por %p227, %p228
      %p230 = scmp.ne.s32.totalorder %s216, %s217
      %p231 = scmp.eq.s32.totalorder %s21, 1
      %p232 = por %p230, %p231
      %p234 = scmp.ne.s32.totalorder %s217, %s233
      %p235 = scmp.eq.s32.totalorder %s21, 0
      %p236 = por %p234, %p235
      %p237 = scmp.le.s32.totalorder 1, %s15
      %p238 = scmp.lt.s32.totalorder %s15, 3
      %p239 = pnand %p237, %p238
      %p240 = pneg %p239
      // Predicated region
      $region9: #{graphormer_layer_forward.2} parent=5 // pred_check
        _
      $region10: #{graphormer_layer_forward.2} parent=5 // pred_check_branch
        %242 = sbr.rel (%p239) target = $region12
      $region11: #{graphormer_layer_forward.2} parent=5 // pred_region
        %s243 = ssub.s32 %s15, 1
        // Predicated region
        $region13: #{graphormer_layer_forward.2} parent=11 // pred_check
          %p244 = pneg %p140
        $region14: #{graphormer_layer_forward.2} parent=11 // pred_check_branch
          %246 = sbr.rel (%p244) target = $region16
        $region15: #{graphormer_layer_forward.2} parent=11 // pred_region
          %s248 = ssub.s32 256, 256
          %249 = vsyncadd [#allocation3], %s248
          %s250 = sshll.u32 %s4, 4
          %s251 = int_to_ptr.vmem [resolvable:$true] %s250
          %256 = dma.vmem_to_smem %s251, 256, [#allocation2], [#allocation3], 128, 128, 8
        $region16: #{graphormer_layer_forward.2} parent=11 // pred_fallthru
          _
        // Predicated region
        $region17: #{graphormer_layer_forward.2} parent=11 // pred_check
          %p257 = pneg %p161
        $region18: #{graphormer_layer_forward.2} parent=11 // pred_check_branch
          %259 = sbr.rel (%p257) target = $region20
        $region19: #{graphormer_layer_forward.2} parent=11 // pred_region
          _
        $region20: #{graphormer_layer_forward.2} parent=11 // pred_fallthru
          _
        // Predicated region
        $region21: #{graphormer_layer_forward.2} parent=11 // pred_check
          %p260 = pneg %p182
        $region22: #{graphormer_layer_forward.2} parent=11 // pred_check_branch
          %262 = sbr.rel (%p260) target = $region24
        $region23: #{graphormer_layer_forward.2} parent=11 // pred_region
          _
        $region24: #{graphormer_layer_forward.2} parent=11 // pred_fallthru
          _
        // Predicated region
        $region25: #{graphormer_layer_forward.2} parent=11 // pred_check
          %p263 = pneg %p203
        $region26: #{graphormer_layer_forward.2} parent=11 // pred_check_branch
          %265 = sbr.rel (%p263) target = $region28
        $region27: #{graphormer_layer_forward.2} parent=11 // pred_region
          _
        $region28: #{graphormer_layer_forward.2} parent=11 // pred_fallthru
          _
      $region12: #{graphormer_layer_forward.2} parent=5 // pred_fallthru
        _
      %p266 = scmp.lt.s32.totalorder %s15, 2
      // Predicated region
      $region29: #{graphormer_layer_forward.2} parent=5 // pred_check
        %p267 = pneg %p266
      $region30: #{graphormer_layer_forward.2} parent=5 // pred_check_branch
        %269 = sbr.rel (%p267) target = $region32
      $region31: #{graphormer_layer_forward.2} parent=5 // pred_region
        // Predicated region
        $region33: #{graphormer_layer_forward.2} parent=31 // pred_check
          %p270 = pneg %p35
        $region34: #{graphormer_layer_forward.2} parent=31 // pred_check_branch
          %272 = sbr.rel (%p270) target = $region36
        $region35: #{graphormer_layer_forward.2} parent=31 // pred_region
          %p273 = scmp.lt.s32.totalorder %s15, 1
          %s274 = scalar_select %p273, %s15, 1
          %s275 = smul.addr %s274, 8
          %s276 = scalar_lea.vmem %s0, %s275
        $region36: #{graphormer_layer_forward.2} parent=31 // pred_fallthru
          _
        // Predicated region
        $region37: #{graphormer_layer_forward.2} parent=31 // pred_check
          %p277 = pneg %p61
        $region38: #{graphormer_layer_forward.2} parent=31 // pred_check_branch
          %279 = sbr.rel (%p277) target = $region40
        $region39: #{graphormer_layer_forward.2} parent=31 // pred_region
          %p280 = scmp.lt.s32.totalorder %s15, 1
          %s281 = scalar_select %p280, %s15, 1
          %s282 = scalar_lea.vmem %s1, %s281
        $region40: #{graphormer_layer_forward.2} parent=31 // pred_fallthru
          _
        // Predicated region
        $region41: #{graphormer_layer_forward.2} parent=31 // pred_check
          %p283 = pneg %p87
        $region42: #{graphormer_layer_forward.2} parent=31 // pred_check_branch
          %285 = sbr.rel (%p283) target = $region44
        $region43: #{graphormer_layer_forward.2} parent=31 // pred_region
          %p286 = scmp.lt.s32.totalorder %s15, 1
          %s287 = scalar_select %p286, %s15, 1
          %s288 = smul.addr %s287, 8
          %s289 = scalar_lea.vmem %s2, %s288
        $region44: #{graphormer_layer_forward.2} parent=31 // pred_fallthru
          _
        // Predicated region
        $region45: #{graphormer_layer_forward.2} parent=31 // pred_check
          %p290 = pneg %p113
        $region46: #{graphormer_layer_forward.2} parent=31 // pred_check_branch
          %292 = sbr.rel (%p290) target = $region48
        $region47: #{graphormer_layer_forward.2} parent=31 // pred_region
          %p293 = scmp.lt.s32.totalorder %s15, 1
          %s294 = scalar_select %p293, %s15, 1
          %s295 = smul.addr %s294, 8
          %s296 = scalar_lea.vmem %s3, %s295
        $region48: #{graphormer_layer_forward.2} parent=31 // pred_fallthru
          _
      $region32: #{graphormer_layer_forward.2} parent=5 // pred_fallthru
        _
      %p297 = scmp.le.s32.totalorder 1, %s15
      %p298 = scmp.lt.s32.totalorder %s15, 3
      %p299 = pnand %p297, %p298
      %p300 = pneg %p299
      // Predicated region
      $region49: #{graphormer_layer_forward.2} parent=5 // pred_check
        _
      $region50: #{graphormer_layer_forward.2} parent=5 // pred_check_branch
        %302 = sbr.rel (%p299) target = $region52
      $region51: #{graphormer_layer_forward.2} parent=5 // pred_region
        %s303 = ssub.s32 %s15, 1
        // Predicated region
        $region53: #{graphormer_layer_forward.2} parent=51 // pred_check
          %p304 = pneg %p140
        $region54: #{graphormer_layer_forward.2} parent=51 // pred_check_branch
          %306 = sbr.rel (%p304) target = $region56
        $region55: #{graphormer_layer_forward.2} parent=51 // pred_region
          %307 = dma.done [#allocation3], 256
        $region56: #{graphormer_layer_forward.2} parent=51 // pred_fallthru
          _
        %308 = sfence
        %p309 = scmp.lt.s32.totalorder %s20, 1
        %s310 = scalar_select %p309, %s20, 1
        %s311 = smul.addr %s310, 8
        %s312 = scalar_lea.vmem %s0, %s311
        %p313 = pneg %p41
        %p314 = pneg %p38
        %p315 = scmp.lt.s32.totalorder %s20, 1
        %s316 = scalar_select %p315, %s20, 1
        %s317 = scalar_lea.vmem %s1, %s316
        %p318 = pneg %p67
        %p319 = pneg %p64
        %p320 = scmp.lt.s32.totalorder %s20, 1
        %s321 = scalar_select %p320, %s20, 1
        %s322 = smul.addr %s321, 8
        %s323 = scalar_lea.vmem %s2, %s322
        %p324 = pneg %p93
        %p325 = pneg %p90
        %p326 = scmp.lt.s32.totalorder %s20, 1
        %s327 = scalar_select %p326, %s20, 1
        %s328 = smul.addr %s327, 8
        %s329 = scalar_lea.vmem %s3, %s328
        %p330 = pneg %p119
        %p331 = pneg %p116
        %p332 = pneg %p140
        %p333 = pneg %p137
        %p334 = pneg %p161
        %p335 = pneg %p158
        %p336 = pneg %p182
        %p337 = pneg %p179
        %p338 = pneg %p203
        %p339 = pneg %p200
        %p340 = pneg %p229
        %p341 = pneg %p226
        %p342 = scmp.lt.s32.totalorder %s20, 1
        %s343 = scalar_select %p342, %s20, 1
        %s344 = smul.addr %s343, 8
        %s345 = scalar_lea.vmem %s8, %s344
        %p346 = scmp.lt.s32.totalorder %s20, 1
        %s347 = scalar_select %p346, %s20, 1
        %s348 = smul.addr %s347, 8
        %s349 = scalar_lea.vmem %s0, %s348
        %p350 = scmp.lt.s32.totalorder %s20, 1
        %s351 = scalar_select %p350, %s20, 1
        %s352 = scalar_lea.vmem %s1, %s351
        %p353 = scmp.lt.s32.totalorder %s20, 1
        %s354 = scalar_select %p353, %s20, 1
        %s355 = smul.addr %s354, 8
        %s356 = scalar_lea.vmem %s2, %s355
        %p357 = scmp.lt.s32.totalorder %s20, 1
        %s358 = scalar_select %p357, %s20, 1
        %s359 = smul.addr %s358, 8
        %s360 = scalar_lea.vmem %s3, %s359
        %p361 = scmp.lt.s32.totalorder %s20, 1
        %s362 = scalar_select %p361, %s20, 1
        %s363 = smul.addr %s362, 8
        %s364 = scalar_lea.vmem %s8, %s363
        %v365 = vld [vmem:[%s349] sm:$0xff]
        %v366 = vld [vmem:[%s5] sm:$0xff]
        %v367 = vld [vmem:[%s5 + $0x8] sm:$0xff]
        %v368 = vld [vmem:[%s5 + $0x10] sm:$0xff]
        %v369 = vld [vmem:[%s5 + $0x18] sm:$0xff]
        %v370 = vld [vmem:[%s5 + $0x20] sm:$0xff]
        %v371 = vld [vmem:[%s5 + $0x28] sm:$0xff]
        %v372 = vld [vmem:[%s5 + $0x30] sm:$0xff]
        %v373 = vld [vmem:[%s5 + $0x38] sm:$0xff]
        %v374 = vld [vmem:[%s5 + $0x40] sm:$0xff]
        %v375 = vld [vmem:[%s5 + $0x48] sm:$0xff]
        %v376 = vld [vmem:[%s5 + $0x50] sm:$0xff]
        %v377 = vld [vmem:[%s5 + $0x58] sm:$0xff]
        %v378 = vld [vmem:[%s5 + $0x60] sm:$0xff]
        %v379 = vld [vmem:[%s5 + $0x68] sm:$0xff]
        %v380 = vld [vmem:[%s5 + $0x70] sm:$0xff]
        %v381 = vld [vmem:[%s5 + $0x78] sm:$0xff]
        %vm382 = vcmask 261120
        %v384 = vsel %vm382, %v365, 0
        %386 = vmatprep.subr.mxu0 0.0
        %387 = vmatpush1.msra.mxu0 0.0
        %388 = vmatprep.subr.mxu0 0.0
        %389 = vmatpush1.msra.mxu0 0.0
        %390 = vmatprep.subr.mxu0 0.0
        %391 = vmatpush1.msra.mxu0 0.0
        %392 = vmatprep.subr.mxu0 0.0
        %393 = vmatpush1.msra.mxu0 0.0
        %394 = vmatprep.subr.mxu0 0.0
        %395 = vmatpush1.msra.mxu0 0.0
        %396 = vmatprep.subr.mxu0 0.0
        %397 = vmatpush1.msra.mxu0 0.0
        %398 = vmatprep.subr.mxu0 0.0
        %399 = vmatpush1.msra.mxu0 0.0
        %400 = vmatprep.subr.mxu0 0.0
        %401 = vmatpush1.msra.mxu0 0.0
        %402 = vmatprep.subr.mxu0 0.0
        %403 = vmatpush1.msra.mxu0 0.0
        %404 = vmatprep.subr.mxu0 0.0
        %405 = vmatpush1.msra.mxu0 0.0
        %406 = vmatprep.subr.mxu0 0.0
        %407 = vmatpush1.msra.mxu0 0.0
        %408 = vmatprep.subr.mxu0 0.0
        %409 = vmatpush1.msra.mxu0 0.0
        %410 = vmatprep.subr.mxu0 0.0
        %411 = vmatpush1.msra.mxu0 %v369
        %412 = vmatprep.subr.mxu0 0.0
        %413 = vmatpush1.msra.mxu0 %v368
        %414 = vmatprep.subr.mxu0 0.0
        %415 = vmatpush1.msra.mxu0 %v367
        %416 = vmatprep.subr.mxu0 0.0
        %417 = vmatpush1.msra.mxu0 %v366
        %418 = vmatprep.subr.mxu0 0.0
        %419 = vmatpush2.msra.mxu0 0.0
        %420 = vmatprep.subr.mxu0 0.0
        %421 = vmatpush2.msra.mxu0 0.0
        %422 = vmatprep.subr.mxu0 0.0
        %423 = vmatpush2.msra.mxu0 0.0
        %424 = vmatprep.subr.mxu0 0.0
        %425 = vmatpush2.msra.mxu0 0.0
        %426 = vmatprep.subr.mxu0 0.0
        %427 = vmatpush2.msra.mxu0 0.0
        %428 = vmatprep.subr.mxu0 0.0
        %429 = vmatpush2.msra.mxu0 0.0
        %430 = vmatprep.subr.mxu0 0.0
        %431 = vmatpush2.msra.mxu0 0.0
        %432 = vmatprep.subr.mxu0 0.0
        %433 = vmatpush2.msra.mxu0 0.0
        %434 = vmatprep.subr.mxu0 0.0
        %435 = vmatpush2.msra.mxu0 0.0
        %436 = vmatprep.subr.mxu0 0.0
        %437 = vmatpush2.msra.mxu0 0.0
        %438 = vmatprep.subr.mxu0 0.0
        %439 = vmatpush2.msra.mxu0 0.0
        %440 = vmatprep.subr.mxu0 0.0
        %441 = vmatpush2.msra.mxu0 0.0
        %442 = vmatprep.subr.mxu0 0.0
        %443 = vmatpush2.msra.mxu0 0.0
        %444 = vmatprep.subr.mxu0 0.0
        %445 = vmatpush2.msra.mxu0 0.0
        %446 = vmatprep.subr.mxu0 0.0
        %447 = vmatpush2.msra.mxu0 0.0
        %448 = vmatprep.subr.mxu0 0.0
        %449 = vmatpush2.msra.mxu0 0.0
        %450 = vmatprep.mubr.f32.mxu0 0.0
        %451 = vmatmul.mubr.f32.gmra.mxu0 %v384
        %v452 = vpop.f32.mrf.mxu0
        %v453 = vadd.f32 0.0, %v452
        %v454 = vpop.f32.mrf.mxu0
        %455 = vdwg.mxu0
        %456 = vmatprep.subr.mxu0 0.0
        %457 = vmatpush1.msra.mxu0 0.0
        %458 = vmatprep.subr.mxu0 0.0
        %459 = vmatpush1.msra.mxu0 0.0
        %460 = vmatprep.subr.mxu0 0.0
        %461 = vmatpush1.msra.mxu0 0.0
        %462 = vmatprep.subr.mxu0 0.0
        %463 = vmatpush1.msra.mxu0 0.0
        %464 = vmatprep.subr.mxu0 0.0
        %465 = vmatpush1.msra.mxu0 0.0
        %466 = vmatprep.subr.mxu0 0.0
        %467 = vmatpush1.msra.mxu0 0.0
        %468 = vmatprep.subr.mxu0 0.0
        %469 = vmatpush1.msra.mxu0 0.0
        %470 = vmatprep.subr.mxu0 0.0
        %471 = vmatpush1.msra.mxu0 0.0
        %472 = vmatprep.subr.mxu0 0.0
        %473 = vmatpush1.msra.mxu0 0.0
        %474 = vmatprep.subr.mxu0 0.0
        %475 = vmatpush1.msra.mxu0 0.0
        %476 = vmatprep.subr.mxu0 0.0
        %477 = vmatpush1.msra.mxu0 0.0
        %478 = vmatprep.subr.mxu0 0.0
        %479 = vmatpush1.msra.mxu0 0.0
        %480 = vmatprep.subr.mxu0 0.0
        %481 = vmatpush1.msra.mxu0 %v373
        %482 = vmatprep.subr.mxu0 0.0
        %483 = vmatpush1.msra.mxu0 %v372
        %484 = vmatprep.subr.mxu0 0.0
        %485 = vmatpush1.msra.mxu0 %v371
        %486 = vmatprep.subr.mxu0 0.0
        %487 = vmatpush1.msra.mxu0 %v370
        %488 = vmatprep.subr.mxu0 0.0
        %489 = vmatpush2.msra.mxu0 0.0
        %490 = vmatprep.subr.mxu0 0.0
        %491 = vmatpush2.msra.mxu0 0.0
        %492 = vmatprep.subr.mxu0 0.0
        %493 = vmatpush2.msra.mxu0 0.0
        %494 = vmatprep.subr.mxu0 0.0
        %495 = vmatpush2.msra.mxu0 0.0
        %496 = vmatprep.subr.mxu0 0.0
        %497 = vmatpush2.msra.mxu0 0.0
        %498 = vmatprep.subr.mxu0 0.0
        %499 = vmatpush2.msra.mxu0 0.0
        %500 = vmatprep.subr.mxu0 0.0
        %501 = vmatpush2.msra.mxu0 0.0
        %502 = vmatprep.subr.mxu0 0.0
        %503 = vmatpush2.msra.mxu0 0.0
        %504 = vmatprep.subr.mxu0 0.0
        %505 = vmatpush2.msra.mxu0 0.0
        %506 = vmatprep.subr.mxu0 0.0
        %507 = vmatpush2.msra.mxu0 0.0
        %508 = vmatprep.subr.mxu0 0.0
        %509 = vmatpush2.msra.mxu0 0.0
        %510 = vmatprep.subr.mxu0 0.0
        %511 = vmatpush2.msra.mxu0 0.0
        %512 = vmatprep.subr.mxu0 0.0
        %513 = vmatpush2.msra.mxu0 0.0
        %514 = vmatprep.subr.mxu0 0.0
        %515 = vmatpush2.msra.mxu0 0.0
        %516 = vmatprep.subr.mxu0 0.0
        %517 = vmatpush2.msra.mxu0 0.0
        %518 = vmatprep.subr.mxu0 0.0
        %519 = vmatpush2.msra.mxu0 0.0
        %520 = vmatprep.mubr.f32.mxu0 0.0
        %521 = vmatmul.mubr.f32.gmra.mxu0 %v384
        %v522 = vpop.f32.mrf.mxu0
        %v523 = vadd.f32 0.0, %v522
        %v524 = vpop.f32.mrf.mxu0
        %525 = vdwg.mxu0
        %526 = vmatprep.subr.mxu0 0.0
        %527 = vmatpush1.msra.mxu0 0.0
        %528 = vmatprep.subr.mxu0 0.0
        %529 = vmatpush1.msra.mxu0 0.0
        %530 = vmatprep.subr.mxu0 0.0
        %531 = vmatpush1.msra.mxu0 0.0
        %532 = vmatprep.subr.mxu0 0.0
        %533 = vmatpush1.msra.mxu0 0.0
        %534 = vmatprep.subr.mxu0 0.0
        %535 = vmatpush1.msra.mxu0 0.0
        %536 = vmatprep.subr.mxu0 0.0
        %537 = vmatpush1.msra.mxu0 0.0
        %538 = vmatprep.subr.mxu0 0.0
        %539 = vmatpush1.msra.mxu0 0.0
        %540 = vmatprep.subr.mxu0 0.0
        %541 = vmatpush1.msra.mxu0 0.0
        %542 = vmatprep.subr.mxu0 0.0
        %543 = vmatpush1.msra.mxu0 0.0
        %544 = vmatprep.subr.mxu0 0.0
        %545 = vmatpush1.msra.mxu0 0.0
        %546 = vmatprep.subr.mxu0 0.0
        %547 = vmatpush1.msra.mxu0 0.0
        %548 = vmatprep.subr.mxu0 0.0
        %549 = vmatpush1.msra.mxu0 0.0
        %550 = vmatprep.subr.mxu0 0.0
        %551 = vmatpush1.msra.mxu0 %v377
        %552 = vmatprep.subr.mxu0 0.0
        %553 = vmatpush1.msra.mxu0 %v376
        %554 = vmatprep.subr.mxu0 0.0
        %555 = vmatpush1.msra.mxu0 %v375
        %556 = vmatprep.subr.mxu0 0.0
        %557 = vmatpush1.msra.mxu0 %v374
        %558 = vmatprep.subr.mxu0 0.0
        %559 = vmatpush2.msra.mxu0 0.0
        %560 = vmatprep.subr.mxu0 0.0
        %561 = vmatpush2.msra.mxu0 0.0
        %562 = vmatprep.subr.mxu0 0.0
        %563 = vmatpush2.msra.mxu0 0.0
        %564 = vmatprep.subr.mxu0 0.0
        %565 = vmatpush2.msra.mxu0 0.0
        %566 = vmatprep.subr.mxu0 0.0
        %567 = vmatpush2.msra.mxu0 0.0
        %568 = vmatprep.subr.mxu0 0.0
        %569 = vmatpush2.msra.mxu0 0.0
        %570 = vmatprep.subr.mxu0 0.0
        %571 = vmatpush2.msra.mxu0 0.0
        %572 = vmatprep.subr.mxu0 0.0
        %573 = vmatpush2.msra.mxu0 0.0
        %574 = vmatprep.subr.mxu0 0.0
        %575 = vmatpush2.msra.mxu0 0.0
        %576 = vmatprep.subr.mxu0 0.0
        %577 = vmatpush2.msra.mxu0 0.0
        %578 = vmatprep.subr.mxu0 0.0
        %579 = vmatpush2.msra.mxu0 0.0
        %580 = vmatprep.subr.mxu0 0.0
        %581 = vmatpush2.msra.mxu0 0.0
        %582 = vmatprep.subr.mxu0 0.0
        %583 = vmatpush2.msra.mxu0 0.0
        %584 = vmatprep.subr.mxu0 0.0
        %585 = vmatpush2.msra.mxu0 0.0
        %586 = vmatprep.subr.mxu0 0.0
        %587 = vmatpush2.msra.mxu0 0.0
        %588 = vmatprep.subr.mxu0 0.0
        %589 = vmatpush2.msra.mxu0 0.0
        %590 = vmatprep.mubr.f32.mxu0 0.0
        %591 = vmatmul.mubr.f32.gmra.mxu0 %v384
        %v592 = vpop.f32.mrf.mxu0
        %v593 = vadd.f32 0.0, %v592
        %v594 = vpop.f32.mrf.mxu0
        %595 = vdwg.mxu0
        %596 = vmatprep.subr.mxu0 0.0
        %597 = vmatpush1.msra.mxu0 0.0
        %598 = vmatprep.subr.mxu0 0.0
        %599 = vmatpush1.msra.mxu0 0.0
        %600 = vmatprep.subr.mxu0 0.0
        %601 = vmatpush1.msra.mxu0 0.0
        %602 = vmatprep.subr.mxu0 0.0
        %603 = vmatpush1.msra.mxu0 0.0
        %604 = vmatprep.subr.mxu0 0.0
        %605 = vmatpush1.msra.mxu0 0.0
        %606 = vmatprep.subr.mxu0 0.0
        %607 = vmatpush1.msra.mxu0 0.0
        %608 = vmatprep.subr.mxu0 0.0
        %609 = vmatpush1.msra.mxu0 0.0
        %610 = vmatprep.subr.mxu0 0.0
        %611 = vmatpush1.msra.mxu0 0.0
        %612 = vmatprep.subr.mxu0 0.0
        %613 = vmatpush1.msra.mxu0 0.0
        %614 = vmatprep.subr.mxu0 0.0
        %615 = vmatpush1.msra.mxu0 0.0
        %616 = vmatprep.subr.mxu0 0.0
        %617 = vmatpush1.msra.mxu0 0.0
        %618 = vmatprep.subr.mxu0 0.0
        %619 = vmatpush1.msra.mxu0 0.0
        %620 = vmatprep.subr.mxu0 0.0
        %621 = vmatpush1.msra.mxu0 %v381
        %622 = vmatprep.subr.mxu0 0.0
        %623 = vmatpush1.msra.mxu0 %v380
        %624 = vmatprep.subr.mxu0 0.0
        %625 = vmatpush1.msra.mxu0 %v379
        %626 = vmatprep.subr.mxu0 0.0
        %627 = vmatpush1.msra.mxu0 %v378
        %628 = vmatprep.subr.mxu0 0.0
        %629 = vmatpush2.msra.mxu0 0.0
        %630 = vmatprep.subr.mxu0 0.0
        %631 = vmatpush2.msra.mxu0 0.0
        %632 = vmatprep.subr.mxu0 0.0
        %633 = vmatpush2.msra.mxu0 0.0
        %634 = vmatprep.subr.mxu0 0.0
        %635 = vmatpush2.msra.mxu0 0.0
        %636 = vmatprep.subr.mxu0 0.0
        %637 = vmatpush2.msra.mxu0 0.0
        %638 = vmatprep.subr.mxu0 0.0
        %639 = vmatpush2.msra.mxu0 0.0
        %640 = vmatprep.subr.mxu0 0.0
        %641 = vmatpush2.msra.mxu0 0.0
        %642 = vmatprep.subr.mxu0 0.0
        %643 = vmatpush2.msra.mxu0 0.0
        %644 = vmatprep.subr.mxu0 0.0
        %645 = vmatpush2.msra.mxu0 0.0
        %646 = vmatprep.subr.mxu0 0.0
        %647 = vmatpush2.msra.mxu0 0.0
        %648 = vmatprep.subr.mxu0 0.0
        %649 = vmatpush2.msra.mxu0 0.0
        %650 = vmatprep.subr.mxu0 0.0
        %651 = vmatpush2.msra.mxu0 0.0
        %652 = vmatprep.subr.mxu0 0.0
        %653 = vmatpush2.msra.mxu0 0.0
        %654 = vmatprep.subr.mxu0 0.0
        %655 = vmatpush2.msra.mxu0 0.0
        %656 = vmatprep.subr.mxu0 0.0
        %657 = vmatpush2.msra.mxu0 0.0
        %658 = vmatprep.subr.mxu0 0.0
        %659 = vmatpush2.msra.mxu0 0.0
        %660 = vmatprep.mubr.f32.mxu0 0.0
        %661 = vmatmul.mubr.f32.gmra.mxu0 %v384
        %v662 = vpop.f32.mrf.mxu0
        %v663 = vadd.f32 0.0, %v662
        %v664 = vpop.f32.mrf.mxu0
        %665 = vdwg.mxu0
        %v666 = vld [vmem:[%s360] sm:$0xff]
        %vm667 = vcmp.eq.s32.totalorder %v666, 1
        %vm668 = vcmp.eq.s32.totalorder %v666, 2
        %vm669 = vcmp.eq.s32.totalorder %v666, 3
        %vm670 = vcmp.eq.s32.totalorder %v666, 4
        %vm671 = vcmp.eq.s32.totalorder %v666, 5
        %vm672 = vcmp.eq.s32.totalorder %v666, 6
        %vm673 = vcmp.eq.s32.totalorder %v666, 7
        %vm674 = vcmp.eq.s32.totalorder %v666, 8
        %vm675 = vcmp.eq.s32.totalorder %v666, 9
        %vm676 = vcmp.eq.s32.totalorder %v666, 10
        %vm677 = vcmp.eq.s32.totalorder %v666, 11
        %vm678 = vcmp.eq.s32.totalorder %v666, 12
        %vm679 = vcmp.eq.s32.totalorder %v666, 13
        %vm680 = vcmp.eq.s32.totalorder %v666, 14
        %vm681 = vcmp.eq.s32.totalorder %v666, 15
        %s682 = sld [smem:[#allocation2]]
        %v683 = vstv %s682
        %s684 = sld [smem:[#allocation2 + $0x80]]
        %v685 = vstv %s684
        %v686 = vsel %vm667, %v685, %v683
        %s687 = sld [smem:[#allocation2 + $0x100]]
        %v688 = vstv %s687
        %v689 = vsel %vm668, %v688, %v686
        %s690 = sld [smem:[#allocation2 + $0x180]]
        %v691 = vstv %s690
        %v692 = vsel %vm669, %v691, %v689
        %s693 = sld [smem:[#allocation2 + $0x200]]
        %v694 = vstv %s693
        %v695 = vsel %vm670, %v694, %v692
        %s696 = sld [smem:[#allocation2 + $0x280]]
        %v697 = vstv %s696
        %v698 = vsel %vm671, %v697, %v695
        %s699 = sld [smem:[#allocation2 + $0x300]]
        %v700 = vstv %s699
        %v701 = vsel %vm672, %v700, %v698
        %s702 = sld [smem:[#allocation2 + $0x380]]
        %v703 = vstv %s702
        %v704 = vsel %vm673, %v703, %v701
        %s705 = sld [smem:[#allocation2 + $0x400]]
        %v706 = vstv %s705
        %v707 = vsel %vm674, %v706, %v704
        %s708 = sld [smem:[#allocation2 + $0x480]]
        %v709 = vstv %s708
        %v710 = vsel %vm675, %v709, %v707
        %s711 = sld [smem:[#allocation2 + $0x500]]
        %v712 = vstv %s711
        %v713 = vsel %vm676, %v712, %v710
        %s714 = sld [smem:[#allocation2 + $0x580]]
        %v715 = vstv %s714
        %v716 = vsel %vm677, %v715, %v713
        %s717 = sld [smem:[#allocation2 + $0x600]]
        %v718 = vstv %s717
        %v719 = vsel %vm678, %v718, %v716
        %s720 = sld [smem:[#allocation2 + $0x680]]
        %v721 = vstv %s720
        %v722 = vsel %vm679, %v721, %v719
        %s723 = sld [smem:[#allocation2 + $0x700]]
        %v724 = vstv %s723
        %v725 = vsel %vm680, %v724, %v722
        %s726 = sld [smem:[#allocation2 + $0x780]]
        %v727 = vstv %s726
        %v728 = vsel %vm681, %v727, %v725
        %s729 = sld [smem:[#allocation2 + $0x1]]
        %v730 = vstv %s729
        %s731 = sld [smem:[#allocation2 + $0x81]]
        %v732 = vstv %s731
        %v733 = vsel %vm667, %v732, %v730
        %s734 = sld [smem:[#allocation2 + $0x101]]
        %v735 = vstv %s734
        %v736 = vsel %vm668, %v735, %v733
        %s737 = sld [smem:[#allocation2 + $0x181]]
        %v738 = vstv %s737
        %v739 = vsel %vm669, %v738, %v736
        %s740 = sld [smem:[#allocation2 + $0x201]]
        %v741 = vstv %s740
        %v742 = vsel %vm670, %v741, %v739
        %s743 = sld [smem:[#allocation2 + $0x281]]
        %v744 = vstv %s743
        %v745 = vsel %vm671, %v744, %v742
        %s746 = sld [smem:[#allocation2 + $0x301]]
        %v747 = vstv %s746
        %v748 = vsel %vm672, %v747, %v745
        %s749 = sld [smem:[#allocation2 + $0x381]]
        %v750 = vstv %s749
        %v751 = vsel %vm673, %v750, %v748
        %s752 = sld [smem:[#allocation2 + $0x401]]
        %v753 = vstv %s752
        %v754 = vsel %vm674, %v753, %v751
        %s755 = sld [smem:[#allocation2 + $0x481]]
        %v756 = vstv %s755
        %v757 = vsel %vm675, %v756, %v754
        %s758 = sld [smem:[#allocation2 + $0x501]]
        %v759 = vstv %s758
        %v760 = vsel %vm676, %v759, %v757
        %s761 = sld [smem:[#allocation2 + $0x581]]
        %v762 = vstv %s761
        %v763 = vsel %vm677, %v762, %v760
        %s764 = sld [smem:[#allocation2 + $0x601]]
        %v765 = vstv %s764
        %v766 = vsel %vm678, %v765, %v763
        %s767 = sld [smem:[#allocation2 + $0x681]]
        %v768 = vstv %s767
        %v769 = vsel %vm679, %v768, %v766
        %s770 = sld [smem:[#allocation2 + $0x701]]
        %v771 = vstv %s770
        %v772 = vsel %vm680, %v771, %v769
        %s773 = sld [smem:[#allocation2 + $0x781]]
        %v774 = vstv %s773
        %v775 = vsel %vm681, %v774, %v772
        %s776 = sld [smem:[#allocation2 + $0x2]]
        %v777 = vstv %s776
        %s778 = sld [smem:[#allocation2 + $0x82]]
        %v779 = vstv %s778
        %v780 = vsel %vm667, %v779, %v777
        %s781 = sld [smem:[#allocation2 + $0x102]]
        %v782 = vstv %s781
        %v783 = vsel %vm668, %v782, %v780
        %s784 = sld [smem:[#allocation2 + $0x182]]
        %v785 = vstv %s784
        %v786 = vsel %vm669, %v785, %v783
        %s787 = sld [smem:[#allocation2 + $0x202]]
        %v788 = vstv %s787
        %v789 = vsel %vm670, %v788, %v786
        %s790 = sld [smem:[#allocation2 + $0x282]]
        %v791 = vstv %s790
        %v792 = vsel %vm671, %v791, %v789
        %s793 = sld [smem:[#allocation2 + $0x302]]
        %v794 = vstv %s793
        %v795 = vsel %vm672, %v794, %v792
        %s796 = sld [smem:[#allocation2 + $0x382]]
        %v797 = vstv %s796
        %v798 = vsel %vm673, %v797, %v795
        %s799 = sld [smem:[#allocation2 + $0x402]]
        %v800 = vstv %s799
        %v801 = vsel %vm674, %v800, %v798
        %s802 = sld [smem:[#allocation2 + $0x482]]
        %v803 = vstv %s802
        %v804 = vsel %vm675, %v803, %v801
        %s805 = sld [smem:[#allocation2 + $0x502]]
        %v806 = vstv %s805
        %v807 = vsel %vm676, %v806, %v804
        %s808 = sld [smem:[#allocation2 + $0x582]]
        %v809 = vstv %s808
        %v810 = vsel %vm677, %v809, %v807
        %s811 = sld [smem:[#allocation2 + $0x602]]
        %v812 = vstv %s811
        %v813 = vsel %vm678, %v812, %v810
        %s814 = sld [smem:[#allocation2 + $0x682]]
        %v815 = vstv %s814
        %v816 = vsel %vm679, %v815, %v813
        %s817 = sld [smem:[#allocation2 + $0x702]]
        %v818 = vstv %s817
        %v819 = vsel %vm680, %v818, %v816
        %s820 = sld [smem:[#allocation2 + $0x782]]
        %v821 = vstv %s820
        %v822 = vsel %vm681, %v821, %v819
        %s823 = sld [smem:[#allocation2 + $0x3]]
        %v824 = vstv %s823
        %s825 = sld [smem:[#allocation2 + $0x83]]
        %v826 = vstv %s825
        %v827 = vsel %vm667, %v826, %v824
        %s828 = sld [smem:[#allocation2 + $0x103]]
        %v829 = vstv %s828
        %v830 = vsel %vm668, %v829, %v827
        %s831 = sld [smem:[#allocation2 + $0x183]]
        %v832 = vstv %s831
        %v833 = vsel %vm669, %v832, %v830
        %s834 = sld [smem:[#allocation2 + $0x203]]
        %v835 = vstv %s834
        %v836 = vsel %vm670, %v835, %v833
        %s837 = sld [smem:[#allocation2 + $0x283]]
        %v838 = vstv %s837
        %v839 = vsel %vm671, %v838, %v836
        %s840 = sld [smem:[#allocation2 + $0x303]]
        %v841 = vstv %s840
        %v842 = vsel %vm672, %v841, %v839
        %s843 = sld [smem:[#allocation2 + $0x383]]
        %v844 = vstv %s843
        %v845 = vsel %vm673, %v844, %v842
        %s846 = sld [smem:[#allocation2 + $0x403]]
        %v847 = vstv %s846
        %v848 = vsel %vm674, %v847, %v845
        %s849 = sld [smem:[#allocation2 + $0x483]]
        %v850 = vstv %s849
        %v851 = vsel %vm675, %v850, %v848
        %s852 = sld [smem:[#allocation2 + $0x503]]
        %v853 = vstv %s852
        %v854 = vsel %vm676, %v853, %v851
        %s855 = sld [smem:[#allocation2 + $0x583]]
        %v856 = vstv %s855
        %v857 = vsel %vm677, %v856, %v854
        %s858 = sld [smem:[#allocation2 + $0x603]]
        %v859 = vstv %s858
        %v860 = vsel %vm678, %v859, %v857
        %s861 = sld [smem:[#allocation2 + $0x683]]
        %v862 = vstv %s861
        %v863 = vsel %vm679, %v862, %v860
        %s864 = sld [smem:[#allocation2 + $0x703]]
        %v865 = vstv %s864
        %v866 = vsel %vm680, %v865, %v863
        %s867 = sld [smem:[#allocation2 + $0x783]]
        %v868 = vstv %s867
        %v869 = vsel %vm681, %v868, %v866
        %v870 = vld [vmem:[%s356] sm:$0xff]
        %v871 = vld [vmem:[%s352] sm:$0x1]
        %873 = vset.pattern.permute.xlu0 0
        %874 = vperm.xlu0 %873, %v870
        %v875 = vpop.permute.xlu0 %874
        %v878 = vlaneseq
        %v879 = vshrl.u32 %v878, 7
        %v880 = vsub.s32 0, %v879
        %v881 = vrot.slane %v871, %v880
        %v883 = vmul.f32 %v875, %v881
        %vm884 = vcmp.gt.f32.partialorder %v883, 0.5
        %886 = vrot.lane.b32.xlu0 %v453, 112
        %v887 = vpop.permute.xlu0 %886
        %vm888 = vcmask 130048
        %v889 = vsel %vm888, %v453, 0
        %v891 = vsel %vm888, %v887, 0
        %893 = vmatprep.subr.mxu0 0.0
        %894 = vmatpush1.xpose.msra.mxu0 0.0
        %895 = vmatprep.subr.mxu0 0.0
        %896 = vmatpush1.xpose.msra.mxu0 0.0
        %897 = vmatprep.subr.mxu0 0.0
        %898 = vmatpush1.xpose.msra.mxu0 0.0
        %899 = vmatprep.subr.mxu0 0.0
        %900 = vmatpush1.xpose.msra.mxu0 0.0
        %901 = vmatprep.subr.mxu0 0.0
        %902 = vmatpush1.xpose.msra.mxu0 0.0
        %903 = vmatprep.subr.mxu0 0.0
        %904 = vmatpush1.xpose.msra.mxu0 0.0
        %905 = vmatprep.subr.mxu0 0.0
        %906 = vmatpush1.xpose.msra.mxu0 0.0
        %907 = vmatprep.subr.mxu0 0.0
        %908 = vmatpush1.xpose.msra.mxu0 0.0
        %909 = vmatprep.subr.mxu0 0.0
        %910 = vmatpush1.xpose.msra.mxu0 0.0
        %911 = vmatprep.subr.mxu0 0.0
        %912 = vmatpush1.xpose.msra.mxu0 0.0
        %913 = vmatprep.subr.mxu0 0.0
        %914 = vmatpush1.xpose.msra.mxu0 0.0
        %915 = vmatprep.subr.mxu0 0.0
        %916 = vmatpush1.xpose.msra.mxu0 0.0
        %917 = vmatprep.subr.mxu0 0.0
        %918 = vmatpush1.xpose.msra.mxu0 0.0
        %919 = vmatprep.subr.mxu0 0.0
        %920 = vmatpush1.xpose.msra.mxu0 0.0
        %921 = vmatprep.subr.mxu0 0.0
        %922 = vmatpush1.xpose.msra.mxu0 0.0
        %923 = vmatprep.subr.mxu0 0.0
        %924 = vmatpush1.xpose.msra.mxu0 %v891
        %925 = vmatprep.subr.mxu0 0.0
        %926 = vmatpush2.xpose.msra.mxu0 0.0
        %927 = vmatprep.subr.mxu0 0.0
        %928 = vmatpush2.xpose.msra.mxu0 0.0
        %929 = vmatprep.subr.mxu0 0.0
        %930 = vmatpush2.xpose.msra.mxu0 0.0
        %931 = vmatprep.subr.mxu0 0.0
        %932 = vmatpush2.xpose.msra.mxu0 0.0
        %933 = vmatprep.subr.mxu0 0.0
        %934 = vmatpush2.xpose.msra.mxu0 0.0
        %935 = vmatprep.subr.mxu0 0.0
        %936 = vmatpush2.xpose.msra.mxu0 0.0
        %937 = vmatprep.subr.mxu0 0.0
        %938 = vmatpush2.xpose.msra.mxu0 0.0
        %939 = vmatprep.subr.mxu0 0.0
        %940 = vmatpush2.xpose.msra.mxu0 0.0
        %941 = vmatprep.subr.mxu0 0.0
        %942 = vmatpush2.xpose.msra.mxu0 0.0
        %943 = vmatprep.subr.mxu0 0.0
        %944 = vmatpush2.xpose.msra.mxu0 0.0
        %945 = vmatprep.subr.mxu0 0.0
        %946 = vmatpush2.xpose.msra.mxu0 0.0
        %947 = vmatprep.subr.mxu0 0.0
        %948 = vmatpush2.xpose.msra.mxu0 0.0
        %949 = vmatprep.subr.mxu0 0.0
        %950 = vmatpush2.xpose.msra.mxu0 0.0
        %951 = vmatprep.subr.mxu0 0.0
        %952 = vmatpush2.xpose.msra.mxu0 0.0
        %953 = vmatprep.subr.mxu0 0.0
        %954 = vmatpush2.xpose.msra.mxu0 0.0
        %955 = vmatprep.subr.mxu0 0.0
        %956 = vmatpush2.xpose.msra.mxu0 0.0
        %957 = vmatprep.mubr.f32.mxu0 0.0
        %958 = vmatmul.mubr.f32.gmra.mxu0 %v889
        %v959 = vpop.f32.mrf.mxu0
        %v960 = vadd.f32 %v728, %v959
        %v961 = vpop.f32.mrf.mxu0
        %962 = vdwg.mxu0
        %964 = vrot.lane.b32.xlu0 %v523, 112
        %v965 = vpop.permute.xlu0 %964
        %v966 = vsel %vm888, %v523, 0
        %v968 = vsel %vm888, %v965, 0
        %970 = vmatprep.subr.mxu0 0.0
        %971 = vmatpush1.xpose.msra.mxu0 0.0
        %972 = vmatprep.subr.mxu0 0.0
        %973 = vmatpush1.xpose.msra.mxu0 0.0
        %974 = vmatprep.subr.mxu0 0.0
        %975 = vmatpush1.xpose.msra.mxu0 0.0
        %976 = vmatprep.subr.mxu0 0.0
        %977 = vmatpush1.xpose.msra.mxu0 0.0
        %978 = vmatprep.subr.mxu0 0.0
        %979 = vmatpush1.xpose.msra.mxu0 0.0
        %980 = vmatprep.subr.mxu0 0.0
        %981 = vmatpush1.xpose.msra.mxu0 0.0
        %982 = vmatprep.subr.mxu0 0.0
        %983 = vmatpush1.xpose.msra.mxu0 0.0
        %984 = vmatprep.subr.mxu0 0.0
        %985 = vmatpush1.xpose.msra.mxu0 0.0
        %986 = vmatprep.subr.mxu0 0.0
        %987 = vmatpush1.xpose.msra.mxu0 0.0
        %988 = vmatprep.subr.mxu0 0.0
        %989 = vmatpush1.xpose.msra.mxu0 0.0
        %990 = vmatprep.subr.mxu0 0.0
        %991 = vmatpush1.xpose.msra.mxu0 0.0
        %992 = vmatprep.subr.mxu0 0.0
        %993 = vmatpush1.xpose.msra.mxu0 0.0
        %994 = vmatprep.subr.mxu0 0.0
        %995 = vmatpush1.xpose.msra.mxu0 0.0
        %996 = vmatprep.subr.mxu0 0.0
        %997 = vmatpush1.xpose.msra.mxu0 0.0
        %998 = vmatprep.subr.mxu0 0.0
        %999 = vmatpush1.xpose.msra.mxu0 0.0
        %1000 = vmatprep.subr.mxu0 0.0
        %1001 = vmatpush1.xpose.msra.mxu0 %v968
        %1002 = vmatprep.subr.mxu0 0.0
        %1003 = vmatpush2.xpose.msra.mxu0 0.0
        %1004 = vmatprep.subr.mxu0 0.0
        %1005 = vmatpush2.xpose.msra.mxu0 0.0
        %1006 = vmatprep.subr.mxu0 0.0
        %1007 = vmatpush2.xpose.msra.mxu0 0.0
        %1008 = vmatprep.subr.mxu0 0.0
        %1009 = vmatpush2.xpose.msra.mxu0 0.0
        %1010 = vmatprep.subr.mxu0 0.0
        %1011 = vmatpush2.xpose.msra.mxu0 0.0
        %1012 = vmatprep.subr.mxu0 0.0
        %1013 = vmatpush2.xpose.msra.mxu0 0.0
        %1014 = vmatprep.subr.mxu0 0.0
        %1015 = vmatpush2.xpose.msra.mxu0 0.0
        %1016 = vmatprep.subr.mxu0 0.0
        %1017 = vmatpush2.xpose.msra.mxu0 0.0
        %1018 = vmatprep.subr.mxu0 0.0
        %1019 = vmatpush2.xpose.msra.mxu0 0.0
        %1020 = vmatprep.subr.mxu0 0.0
        %1021 = vmatpush2.xpose.msra.mxu0 0.0
        %1022 = vmatprep.subr.mxu0 0.0
        %1023 = vmatpush2.xpose.msra.mxu0 0.0
        %1024 = vmatprep.subr.mxu0 0.0
        %1025 = vmatpush2.xpose.msra.mxu0 0.0
        %1026 = vmatprep.subr.mxu0 0.0
        %1027 = vmatpush2.xpose.msra.mxu0 0.0
        %1028 = vmatprep.subr.mxu0 0.0
        %1029 = vmatpush2.xpose.msra.mxu0 0.0
        %1030 = vmatprep.subr.mxu0 0.0
        %1031 = vmatpush2.xpose.msra.mxu0 0.0
        %1032 = vmatprep.subr.mxu0 0.0
        %1033 = vmatpush2.xpose.msra.mxu0 0.0
        %1034 = vmatprep.mubr.f32.mxu0 0.0
        %1035 = vmatmul.mubr.f32.gmra.mxu0 %v966
        %v1036 = vpop.f32.mrf.mxu0
        %v1037 = vadd.f32 %v775, %v1036
        %v1038 = vpop.f32.mrf.mxu0
        %1039 = vdwg.mxu0
        %1041 = vrot.lane.b32.xlu0 %v593, 112
        %v1042 = vpop.permute.xlu0 %1041
        %v1043 = vsel %vm888, %v593, 0
        %v1045 = vsel %vm888, %v1042, 0
        %1047 = vmatprep.subr.mxu0 0.0
        %1048 = vmatpush1.xpose.msra.mxu0 0.0
        %1049 = vmatprep.subr.mxu0 0.0
        %1050 = vmatpush1.xpose.msra.mxu0 0.0
        %1051 = vmatprep.subr.mxu0 0.0
        %1052 = vmatpush1.xpose.msra.mxu0 0.0
        %1053 = vmatprep.subr.mxu0 0.0
        %1054 = vmatpush1.xpose.msra.mxu0 0.0
        %1055 = vmatprep.subr.mxu0 0.0
        %1056 = vmatpush1.xpose.msra.mxu0 0.0
        %1057 = vmatprep.subr.mxu0 0.0
        %1058 = vmatpush1.xpose.msra.mxu0 0.0
        %1059 = vmatprep.subr.mxu0 0.0
        %1060 = vmatpush1.xpose.msra.mxu0 0.0
        %1061 = vmatprep.subr.mxu0 0.0
        %1062 = vmatpush1.xpose.msra.mxu0 0.0
        %1063 = vmatprep.subr.mxu0 0.0
        %1064 = vmatpush1.xpose.msra.mxu0 0.0
        %1065 = vmatprep.subr.mxu0 0.0
        %1066 = vmatpush1.xpose.msra.mxu0 0.0
        %1067 = vmatprep.subr.mxu0 0.0
        %1068 = vmatpush1.xpose.msra.mxu0 0.0
        %1069 = vmatprep.subr.mxu0 0.0
        %1070 = vmatpush1.xpose.msra.mxu0 0.0
        %1071 = vmatprep.subr.mxu0 0.0
        %1072 = vmatpush1.xpose.msra.mxu0 0.0
        %1073 = vmatprep.subr.mxu0 0.0
        %1074 = vmatpush1.xpose.msra.mxu0 0.0
        %1075 = vmatprep.subr.mxu0 0.0
        %1076 = vmatpush1.xpose.msra.mxu0 0.0
        %1077 = vmatprep.subr.mxu0 0.0
        %1078 = vmatpush1.xpose.msra.mxu0 %v1045
        %1079 = vmatprep.subr.mxu0 0.0
        %1080 = vmatpush2.xpose.msra.mxu0 0.0
        %1081 = vmatprep.subr.mxu0 0.0
        %1082 = vmatpush2.xpose.msra.mxu0 0.0
        %1083 = vmatprep.subr.mxu0 0.0
        %1084 = vmatpush2.xpose.msra.mxu0 0.0
        %1085 = vmatprep.subr.mxu0 0.0
        %1086 = vmatpush2.xpose.msra.mxu0 0.0
        %1087 = vmatprep.subr.mxu0 0.0
        %1088 = vmatpush2.xpose.msra.mxu0 0.0
        %1089 = vmatprep.subr.mxu0 0.0
        %1090 = vmatpush2.xpose.msra.mxu0 0.0
        %1091 = vmatprep.subr.mxu0 0.0
        %1092 = vmatpush2.xpose.msra.mxu0 0.0
        %1093 = vmatprep.subr.mxu0 0.0
        %1094 = vmatpush2.xpose.msra.mxu0 0.0
        %1095 = vmatprep.subr.mxu0 0.0
        %1096 = vmatpush2.xpose.msra.mxu0 0.0
        %1097 = vmatprep.subr.mxu0 0.0
        %1098 = vmatpush2.xpose.msra.mxu0 0.0
        %1099 = vmatprep.subr.mxu0 0.0
        %1100 = vmatpush2.xpose.msra.mxu0 0.0
        %1101 = vmatprep.subr.mxu0 0.0
        %1102 = vmatpush2.xpose.msra.mxu0 0.0
        %1103 = vmatprep.subr.mxu0 0.0
        %1104 = vmatpush2.xpose.msra.mxu0 0.0
        %1105 = vmatprep.subr.mxu0 0.0
        %1106 = vmatpush2.xpose.msra.mxu0 0.0
        %1107 = vmatprep.subr.mxu0 0.0
        %1108 = vmatpush2.xpose.msra.mxu0 0.0
        %1109 = vmatprep.subr.mxu0 0.0
        %1110 = vmatpush2.xpose.msra.mxu0 0.0
        %1111 = vmatprep.mubr.f32.mxu0 0.0
        %1112 = vmatmul.mubr.f32.gmra.mxu0 %v1043
        %v1113 = vpop.f32.mrf.mxu0
        %v1114 = vadd.f32 %v822, %v1113
        %v1115 = vpop.f32.mrf.mxu0
        %1116 = vdwg.mxu0
        %1118 = vrot.lane.b32.xlu0 %v663, 112
        %v1119 = vpop.permute.xlu0 %1118
        %v1120 = vsel %vm888, %v663, 0
        %v1122 = vsel %vm888, %v1119, 0
        %1124 = vmatprep.subr.mxu0 0.0
        %1125 = vmatpush1.xpose.msra.mxu0 0.0
        %1126 = vmatprep.subr.mxu0 0.0
        %1127 = vmatpush1.xpose.msra.mxu0 0.0
        %1128 = vmatprep.subr.mxu0 0.0
        %1129 = vmatpush1.xpose.msra.mxu0 0.0
        %1130 = vmatprep.subr.mxu0 0.0
        %1131 = vmatpush1.xpose.msra.mxu0 0.0
        %1132 = vmatprep.subr.mxu0 0.0
        %1133 = vmatpush1.xpose.msra.mxu0 0.0
        %1134 = vmatprep.subr.mxu0 0.0
        %1135 = vmatpush1.xpose.msra.mxu0 0.0
        %1136 = vmatprep.subr.mxu0 0.0
        %1137 = vmatpush1.xpose.msra.mxu0 0.0
        %1138 = vmatprep.subr.mxu0 0.0
        %1139 = vmatpush1.xpose.msra.mxu0 0.0
        %1140 = vmatprep.subr.mxu0 0.0
        %1141 = vmatpush1.xpose.msra.mxu0 0.0
        %1142 = vmatprep.subr.mxu0 0.0
        %1143 = vmatpush1.xpose.msra.mxu0 0.0
        %1144 = vmatprep.subr.mxu0 0.0
        %1145 = vmatpush1.xpose.msra.mxu0 0.0
        %1146 = vmatprep.subr.mxu0 0.0
        %1147 = vmatpush1.xpose.msra.mxu0 0.0
        %1148 = vmatprep.subr.mxu0 0.0
        %1149 = vmatpush1.xpose.msra.mxu0 0.0
        %1150 = vmatprep.subr.mxu0 0.0
        %1151 = vmatpush1.xpose.msra.mxu0 0.0
        %1152 = vmatprep.subr.mxu0 0.0
        %1153 = vmatpush1.xpose.msra.mxu0 0.0
        %1154 = vmatprep.subr.mxu0 0.0
        %1155 = vmatpush1.xpose.msra.mxu0 %v1122
        %1156 = vmatprep.subr.mxu0 0.0
        %1157 = vmatpush2.xpose.msra.mxu0 0.0
        %1158 = vmatprep.subr.mxu0 0.0
        %1159 = vmatpush2.xpose.msra.mxu0 0.0
        %1160 = vmatprep.subr.mxu0 0.0
        %1161 = vmatpush2.xpose.msra.mxu0 0.0
        %1162 = vmatprep.subr.mxu0 0.0
        %1163 = vmatpush2.xpose.msra.mxu0 0.0
        %1164 = vmatprep.subr.mxu0 0.0
        %1165 = vmatpush2.xpose.msra.mxu0 0.0
        %1166 = vmatprep.subr.mxu0 0.0
        %1167 = vmatpush2.xpose.msra.mxu0 0.0
        %1168 = vmatprep.subr.mxu0 0.0
        %1169 = vmatpush2.xpose.msra.mxu0 0.0
        %1170 = vmatprep.subr.mxu0 0.0
        %1171 = vmatpush2.xpose.msra.mxu0 0.0
        %1172 = vmatprep.subr.mxu0 0.0
        %1173 = vmatpush2.xpose.msra.mxu0 0.0
        %1174 = vmatprep.subr.mxu0 0.0
        %1175 = vmatpush2.xpose.msra.mxu0 0.0
        %1176 = vmatprep.subr.mxu0 0.0
        %1177 = vmatpush2.xpose.msra.mxu0 0.0
        %1178 = vmatprep.subr.mxu0 0.0
        %1179 = vmatpush2.xpose.msra.mxu0 0.0
        %1180 = vmatprep.subr.mxu0 0.0
        %1181 = vmatpush2.xpose.msra.mxu0 0.0
        %1182 = vmatprep.subr.mxu0 0.0
        %1183 = vmatpush2.xpose.msra.mxu0 0.0
        %1184 = vmatprep.subr.mxu0 0.0
        %1185 = vmatpush2.xpose.msra.mxu0 0.0
        %1186 = vmatprep.subr.mxu0 0.0
        %1187 = vmatpush2.xpose.msra.mxu0 0.0
        %1188 = vmatprep.mubr.f32.mxu0 0.0
        %1189 = vmatmul.mubr.f32.gmra.mxu0 %v1120
        %v1190 = vpop.f32.mrf.mxu0
        %v1191 = vadd.f32 %v869, %v1190
        %v1192 = vpop.f32.mrf.mxu0
        %1193 = vdwg.mxu0
        %v1194 = vsel %vm884, 1, 0
        %vm1195 = vcmp.eq.s32.totalorder %v1194, 1
        %v1196 = vsel %vm1195, %v960, -3.4028235e+38
        %v1197 = vsel %vm1195, %v1037, -3.4028235e+38
        %v1198 = vsel %vm1195, %v1114, -3.4028235e+38
        %v1199 = vsel %vm1195, %v1191, -3.4028235e+38
        %vm1200 = vcmask 64512
        %v1201 = vsel %vm1200, %v1196, -inf
        %1202 = vmax.xlane.f32.xlu0 %v1201
        %v1203 = vpop.xlane.xlu0 %1202
        %v1204 = vsel %vm1200, %v1197, -inf
        %1205 = vmax.xlane.f32.xlu0 %v1204
        %v1206 = vpop.xlane.xlu0 %1205
        %v1207 = vsel %vm1200, %v1198, -inf
        %1208 = vmax.xlane.f32.xlu0 %v1207
        %v1209 = vpop.xlane.xlu0 %1208
        %v1210 = vsel %vm1200, %v1199, -inf
        %1211 = vmax.xlane.f32.xlu0 %v1210
        %v1212 = vpop.xlane.xlu0 %1211
        %v1213 = vsub.f32 %v1196, %v1203
        %v1214 = vsub.f32 %v1197, %v1206
        %v1215 = vsub.f32 %v1198, %v1209
        %v1216 = vsub.f32 %v1199, %v1212
        %v1217 = vmul.f32 %v1213, 1.442695
        %v1218 = vpow.pop %v1217
        %v1219 = vmul.f32 %v1214, 1.442695
        %v1220 = vpow.pop %v1219
        %v1221 = vmul.f32 %v1215, 1.442695
        %v1222 = vpow.pop %v1221
        %v1223 = vmul.f32 %v1216, 1.442695
        %v1224 = vpow.pop %v1223
        %v1225 = vsel %vm1200, %v1218, 0.0
        %1226 = vadd.xlane.f32.xlu0 %v1225
        %v1227 = vpop.xlane.xlu0 %1226
        %v1228 = vsel %vm1200, %v1220, 0.0
        %1229 = vadd.xlane.f32.xlu0 %v1228
        %v1230 = vpop.xlane.xlu0 %1229
        %v1231 = vsel %vm1200, %v1222, 0.0
        %1232 = vadd.xlane.f32.xlu0 %v1231
        %v1233 = vpop.xlane.xlu0 %1232
        %v1234 = vsel %vm1200, %v1224, 0.0
        %1235 = vadd.xlane.f32.xlu0 %v1234
        %v1236 = vpop.xlane.xlu0 %1235
        %v1237 = vrcp.pop %v1227
        %v1238 = vmul.f32 %v1218, %v1237
        %v1239 = vrcp.pop %v1230
        %v1240 = vmul.f32 %v1220, %v1239
        %v1241 = vrcp.pop %v1233
        %v1242 = vmul.f32 %v1222, %v1241
        %v1243 = vrcp.pop %v1236
        %v1244 = vmul.f32 %v1224, %v1243
        %1245 = vrot.lane.b32.xlu0 %v453, 96
        %v1246 = vpop.permute.xlu0 %1245
        %v1249 = vsel %vm1200, %v1238, 0
        %1251 = vmatprep.subr.mxu0 0.0
        %1252 = vmatpush1.msra.mxu0 0.0
        %1253 = vmatprep.subr.mxu0 0.0
        %1254 = vmatpush1.msra.mxu0 0.0
        %1255 = vmatprep.subr.mxu0 0.0
        %1256 = vmatpush1.msra.mxu0 0.0
        %1257 = vmatprep.subr.mxu0 0.0
        %1258 = vmatpush1.msra.mxu0 0.0
        %1259 = vmatprep.subr.mxu0 0.0
        %1260 = vmatpush1.msra.mxu0 0.0
        %1261 = vmatprep.subr.mxu0 0.0
        %1262 = vmatpush1.msra.mxu0 0.0
        %1263 = vmatprep.subr.mxu0 0.0
        %1264 = vmatpush1.msra.mxu0 0.0
        %1265 = vmatprep.subr.mxu0 0.0
        %1266 = vmatpush1.msra.mxu0 0.0
        %1267 = vmatprep.subr.mxu0 0.0
        %1268 = vmatpush1.msra.mxu0 0.0
        %1269 = vmatprep.subr.mxu0 0.0
        %1270 = vmatpush1.msra.mxu0 0.0
        %1271 = vmatprep.subr.mxu0 0.0
        %1272 = vmatpush1.msra.mxu0 0.0
        %1273 = vmatprep.subr.mxu0 0.0
        %1274 = vmatpush1.msra.mxu0 0.0
        %1275 = vmatprep.subr.mxu0 0.0
        %1276 = vmatpush1.msra.mxu0 0.0
        %1277 = vmatprep.subr.mxu0 0.0
        %1278 = vmatpush1.msra.mxu0 0.0
        %1279 = vmatprep.subr.mxu0 0.0
        %1280 = vmatpush1.msra.mxu0 0.0
        %1281 = vmatprep.subr.mxu0 0.0
        %1282 = vmatpush1.msra.mxu0 %v1246
        %1283 = vmatprep.subr.mxu0 0.0
        %1284 = vmatpush2.msra.mxu0 0.0
        %1285 = vmatprep.subr.mxu0 0.0
        %1286 = vmatpush2.msra.mxu0 0.0
        %1287 = vmatprep.subr.mxu0 0.0
        %1288 = vmatpush2.msra.mxu0 0.0
        %1289 = vmatprep.subr.mxu0 0.0
        %1290 = vmatpush2.msra.mxu0 0.0
        %1291 = vmatprep.subr.mxu0 0.0
        %1292 = vmatpush2.msra.mxu0 0.0
        %1293 = vmatprep.subr.mxu0 0.0
        %1294 = vmatpush2.msra.mxu0 0.0
        %1295 = vmatprep.subr.mxu0 0.0
        %1296 = vmatpush2.msra.mxu0 0.0
        %1297 = vmatprep.subr.mxu0 0.0
        %1298 = vmatpush2.msra.mxu0 0.0
        %1299 = vmatprep.subr.mxu0 0.0
        %1300 = vmatpush2.msra.mxu0 0.0
        %1301 = vmatprep.subr.mxu0 0.0
        %1302 = vmatpush2.msra.mxu0 0.0
        %1303 = vmatprep.subr.mxu0 0.0
        %1304 = vmatpush2.msra.mxu0 0.0
        %1305 = vmatprep.subr.mxu0 0.0
        %1306 = vmatpush2.msra.mxu0 0.0
        %1307 = vmatprep.subr.mxu0 0.0
        %1308 = vmatpush2.msra.mxu0 0.0
        %1309 = vmatprep.subr.mxu0 0.0
        %1310 = vmatpush2.msra.mxu0 0.0
        %1311 = vmatprep.subr.mxu0 0.0
        %1312 = vmatpush2.msra.mxu0 0.0
        %1313 = vmatprep.subr.mxu0 0.0
        %1314 = vmatpush2.msra.mxu0 0.0
        %1315 = vmatprep.mubr.f32.mxu0 0.0
        %1316 = vmatmul.mubr.f32.gmra.mxu0 %v1249
        %v1317 = vpop.f32.mrf.mxu0
        %v1318 = vadd.f32 0.0, %v1317
        %v1319 = vpop.f32.mrf.mxu0
        %1320 = vdwg.mxu0
        %1321 = vrot.lane.b32.xlu0 %v523, 96
        %v1322 = vpop.permute.xlu0 %1321
        %v1325 = vsel %vm1200, %v1240, 0
        %1327 = vmatprep.subr.mxu0 0.0
        %1328 = vmatpush1.msra.mxu0 0.0
        %1329 = vmatprep.subr.mxu0 0.0
        %1330 = vmatpush1.msra.mxu0 0.0
        %1331 = vmatprep.subr.mxu0 0.0
        %1332 = vmatpush1.msra.mxu0 0.0
        %1333 = vmatprep.subr.mxu0 0.0
        %1334 = vmatpush1.msra.mxu0 0.0
        %1335 = vmatprep.subr.mxu0 0.0
        %1336 = vmatpush1.msra.mxu0 0.0
        %1337 = vmatprep.subr.mxu0 0.0
        %1338 = vmatpush1.msra.mxu0 0.0
        %1339 = vmatprep.subr.mxu0 0.0
        %1340 = vmatpush1.msra.mxu0 0.0
        %1341 = vmatprep.subr.mxu0 0.0
        %1342 = vmatpush1.msra.mxu0 0.0
        %1343 = vmatprep.subr.mxu0 0.0
        %1344 = vmatpush1.msra.mxu0 0.0
        %1345 = vmatprep.subr.mxu0 0.0
        %1346 = vmatpush1.msra.mxu0 0.0
        %1347 = vmatprep.subr.mxu0 0.0
        %1348 = vmatpush1.msra.mxu0 0.0
        %1349 = vmatprep.subr.mxu0 0.0
        %1350 = vmatpush1.msra.mxu0 0.0
        %1351 = vmatprep.subr.mxu0 0.0
        %1352 = vmatpush1.msra.mxu0 0.0
        %1353 = vmatprep.subr.mxu0 0.0
        %1354 = vmatpush1.msra.mxu0 0.0
        %1355 = vmatprep.subr.mxu0 0.0
        %1356 = vmatpush1.msra.mxu0 0.0
        %1357 = vmatprep.subr.mxu0 0.0
        %1358 = vmatpush1.msra.mxu0 %v1322
        %1359 = vmatprep.subr.mxu0 0.0
        %1360 = vmatpush2.msra.mxu0 0.0
        %1361 = vmatprep.subr.mxu0 0.0
        %1362 = vmatpush2.msra.mxu0 0.0
        %1363 = vmatprep.subr.mxu0 0.0
        %1364 = vmatpush2.msra.mxu0 0.0
        %1365 = vmatprep.subr.mxu0 0.0
        %1366 = vmatpush2.msra.mxu0 0.0
        %1367 = vmatprep.subr.mxu0 0.0
        %1368 = vmatpush2.msra.mxu0 0.0
        %1369 = vmatprep.subr.mxu0 0.0
        %1370 = vmatpush2.msra.mxu0 0.0
        %1371 = vmatprep.subr.mxu0 0.0
        %1372 = vmatpush2.msra.mxu0 0.0
        %1373 = vmatprep.subr.mxu0 0.0
        %1374 = vmatpush2.msra.mxu0 0.0
        %1375 = vmatprep.subr.mxu0 0.0
        %1376 = vmatpush2.msra.mxu0 0.0
        %1377 = vmatprep.subr.mxu0 0.0
        %1378 = vmatpush2.msra.mxu0 0.0
        %1379 = vmatprep.subr.mxu0 0.0
        %1380 = vmatpush2.msra.mxu0 0.0
        %1381 = vmatprep.subr.mxu0 0.0
        %1382 = vmatpush2.msra.mxu0 0.0
        %1383 = vmatprep.subr.mxu0 0.0
        %1384 = vmatpush2.msra.mxu0 0.0
        %1385 = vmatprep.subr.mxu0 0.0
        %1386 = vmatpush2.msra.mxu0 0.0
        %1387 = vmatprep.subr.mxu0 0.0
        %1388 = vmatpush2.msra.mxu0 0.0
        %1389 = vmatprep.subr.mxu0 0.0
        %1390 = vmatpush2.msra.mxu0 0.0
        %1391 = vmatprep.mubr.f32.mxu0 0.0
        %1392 = vmatmul.mubr.f32.gmra.mxu0 %v1325
        %v1393 = vpop.f32.mrf.mxu0
        %v1394 = vadd.f32 0.0, %v1393
        %v1395 = vpop.f32.mrf.mxu0
        %1396 = vdwg.mxu0
        %1397 = vrot.lane.b32.xlu0 %v593, 96
        %v1398 = vpop.permute.xlu0 %1397
        %v1401 = vsel %vm1200, %v1242, 0
        %1403 = vmatprep.subr.mxu0 0.0
        %1404 = vmatpush1.msra.mxu0 0.0
        %1405 = vmatprep.subr.mxu0 0.0
        %1406 = vmatpush1.msra.mxu0 0.0
        %1407 = vmatprep.subr.mxu0 0.0
        %1408 = vmatpush1.msra.mxu0 0.0
        %1409 = vmatprep.subr.mxu0 0.0
        %1410 = vmatpush1.msra.mxu0 0.0
        %1411 = vmatprep.subr.mxu0 0.0
        %1412 = vmatpush1.msra.mxu0 0.0
        %1413 = vmatprep.subr.mxu0 0.0
        %1414 = vmatpush1.msra.mxu0 0.0
        %1415 = vmatprep.subr.mxu0 0.0
        %1416 = vmatpush1.msra.mxu0 0.0
        %1417 = vmatprep.subr.mxu0 0.0
        %1418 = vmatpush1.msra.mxu0 0.0
        %1419 = vmatprep.subr.mxu0 0.0
        %1420 = vmatpush1.msra.mxu0 0.0
        %1421 = vmatprep.subr.mxu0 0.0
        %1422 = vmatpush1.msra.mxu0 0.0
        %1423 = vmatprep.subr.mxu0 0.0
        %1424 = vmatpush1.msra.mxu0 0.0
        %1425 = vmatprep.subr.mxu0 0.0
        %1426 = vmatpush1.msra.mxu0 0.0
        %1427 = vmatprep.subr.mxu0 0.0
        %1428 = vmatpush1.msra.mxu0 0.0
        %1429 = vmatprep.subr.mxu0 0.0
        %1430 = vmatpush1.msra.mxu0 0.0
        %1431 = vmatprep.subr.mxu0 0.0
        %1432 = vmatpush1.msra.mxu0 0.0
        %1433 = vmatprep.subr.mxu0 0.0
        %1434 = vmatpush1.msra.mxu0 %v1398
        %1435 = vmatprep.subr.mxu0 0.0
        %1436 = vmatpush2.msra.mxu0 0.0
        %1437 = vmatprep.subr.mxu0 0.0
        %1438 = vmatpush2.msra.mxu0 0.0
        %1439 = vmatprep.subr.mxu0 0.0
        %1440 = vmatpush2.msra.mxu0 0.0
        %1441 = vmatprep.subr.mxu0 0.0
        %1442 = vmatpush2.msra.mxu0 0.0
        %1443 = vmatprep.subr.mxu0 0.0
        %1444 = vmatpush2.msra.mxu0 0.0
        %1445 = vmatprep.subr.mxu0 0.0
        %1446 = vmatpush2.msra.mxu0 0.0
        %1447 = vmatprep.subr.mxu0 0.0
        %1448 = vmatpush2.msra.mxu0 0.0
        %1449 = vmatprep.subr.mxu0 0.0
        %1450 = vmatpush2.msra.mxu0 0.0
        %1451 = vmatprep.subr.mxu0 0.0
        %1452 = vmatpush2.msra.mxu0 0.0
        %1453 = vmatprep.subr.mxu0 0.0
        %1454 = vmatpush2.msra.mxu0 0.0
        %1455 = vmatprep.subr.mxu0 0.0
        %1456 = vmatpush2.msra.mxu0 0.0
        %1457 = vmatprep.subr.mxu0 0.0
        %1458 = vmatpush2.msra.mxu0 0.0
        %1459 = vmatprep.subr.mxu0 0.0
        %1460 = vmatpush2.msra.mxu0 0.0
        %1461 = vmatprep.subr.mxu0 0.0
        %1462 = vmatpush2.msra.mxu0 0.0
        %1463 = vmatprep.subr.mxu0 0.0
        %1464 = vmatpush2.msra.mxu0 0.0
        %1465 = vmatprep.subr.mxu0 0.0
        %1466 = vmatpush2.msra.mxu0 0.0
        %1467 = vmatprep.mubr.f32.mxu0 0.0
        %1468 = vmatmul.mubr.f32.gmra.mxu0 %v1401
        %v1469 = vpop.f32.mrf.mxu0
        %v1470 = vadd.f32 0.0, %v1469
        %v1471 = vpop.f32.mrf.mxu0
        %1472 = vdwg.mxu0
        %1473 = vrot.lane.b32.xlu0 %v663, 96
        %v1474 = vpop.permute.xlu0 %1473
        %v1477 = vsel %vm1200, %v1244, 0
        %1479 = vmatprep.subr.mxu0 0.0
        %1480 = vmatpush1.msra.mxu0 0.0
        %1481 = vmatprep.subr.mxu0 0.0
        %1482 = vmatpush1.msra.mxu0 0.0
        %1483 = vmatprep.subr.mxu0 0.0
        %1484 = vmatpush1.msra.mxu0 0.0
        %1485 = vmatprep.subr.mxu0 0.0
        %1486 = vmatpush1.msra.mxu0 0.0
        %1487 = vmatprep.subr.mxu0 0.0
        %1488 = vmatpush1.msra.mxu0 0.0
        %1489 = vmatprep.subr.mxu0 0.0
        %1490 = vmatpush1.msra.mxu0 0.0
        %1491 = vmatprep.subr.mxu0 0.0
        %1492 = vmatpush1.msra.mxu0 0.0
        %1493 = vmatprep.subr.mxu0 0.0
        %1494 = vmatpush1.msra.mxu0 0.0
        %1495 = vmatprep.subr.mxu0 0.0
        %1496 = vmatpush1.msra.mxu0 0.0
        %1497 = vmatprep.subr.mxu0 0.0
        %1498 = vmatpush1.msra.mxu0 0.0
        %1499 = vmatprep.subr.mxu0 0.0
        %1500 = vmatpush1.msra.mxu0 0.0
        %1501 = vmatprep.subr.mxu0 0.0
        %1502 = vmatpush1.msra.mxu0 0.0
        %1503 = vmatprep.subr.mxu0 0.0
        %1504 = vmatpush1.msra.mxu0 0.0
        %1505 = vmatprep.subr.mxu0 0.0
        %1506 = vmatpush1.msra.mxu0 0.0
        %1507 = vmatprep.subr.mxu0 0.0
        %1508 = vmatpush1.msra.mxu0 0.0
        %1509 = vmatprep.subr.mxu0 0.0
        %1510 = vmatpush1.msra.mxu0 %v1474
        %1511 = vmatprep.subr.mxu0 0.0
        %1512 = vmatpush2.msra.mxu0 0.0
        %1513 = vmatprep.subr.mxu0 0.0
        %1514 = vmatpush2.msra.mxu0 0.0
        %1515 = vmatprep.subr.mxu0 0.0
        %1516 = vmatpush2.msra.mxu0 0.0
        %1517 = vmatprep.subr.mxu0 0.0
        %1518 = vmatpush2.msra.mxu0 0.0
        %1519 = vmatprep.subr.mxu0 0.0
        %1520 = vmatpush2.msra.mxu0 0.0
        %1521 = vmatprep.subr.mxu0 0.0
        %1522 = vmatpush2.msra.mxu0 0.0
        %1523 = vmatprep.subr.mxu0 0.0
        %1524 = vmatpush2.msra.mxu0 0.0
        %1525 = vmatprep.subr.mxu0 0.0
        %1526 = vmatpush2.msra.mxu0 0.0
        %1527 = vmatprep.subr.mxu0 0.0
        %1528 = vmatpush2.msra.mxu0 0.0
        %1529 = vmatprep.subr.mxu0 0.0
        %1530 = vmatpush2.msra.mxu0 0.0
        %1531 = vmatprep.subr.mxu0 0.0
        %1532 = vmatpush2.msra.mxu0 0.0
        %1533 = vmatprep.subr.mxu0 0.0
        %1534 = vmatpush2.msra.mxu0 0.0
        %1535 = vmatprep.subr.mxu0 0.0
        %1536 = vmatpush2.msra.mxu0 0.0
        %1537 = vmatprep.subr.mxu0 0.0
        %1538 = vmatpush2.msra.mxu0 0.0
        %1539 = vmatprep.subr.mxu0 0.0
        %1540 = vmatpush2.msra.mxu0 0.0
        %1541 = vmatprep.subr.mxu0 0.0
        %1542 = vmatpush2.msra.mxu0 0.0
        %1543 = vmatprep.mubr.f32.mxu0 0.0
        %1544 = vmatmul.mubr.f32.gmra.mxu0 %v1477
        %v1545 = vpop.f32.mrf.mxu0
        %v1546 = vadd.f32 0.0, %v1545
        %v1547 = vpop.f32.mrf.mxu0
        %1548 = vdwg.mxu0
        %v1549 = vld [vmem:[%s6] sm:$0xff]
        %v1550 = vld [vmem:[%s6 + $0x8] sm:$0xff]
        %v1551 = vld [vmem:[%s6 + $0x10] sm:$0xff]
        %v1552 = vld [vmem:[%s6 + $0x18] sm:$0xff]
        %v1553 = vld [vmem:[%s6 + $0x20] sm:$0xff]
        %v1554 = vld [vmem:[%s6 + $0x28] sm:$0xff]
        %v1555 = vld [vmem:[%s6 + $0x30] sm:$0xff]
        %v1556 = vld [vmem:[%s6 + $0x38] sm:$0xff]
        %v1558 = vsel %vm888, %v1318, 0
        %1560 = vmatprep.subr.mxu0 0.0
        %1561 = vmatpush1.msra.mxu0 0.0
        %1562 = vmatprep.subr.mxu0 0.0
        %1563 = vmatpush1.msra.mxu0 0.0
        %1564 = vmatprep.subr.mxu0 0.0
        %1565 = vmatpush1.msra.mxu0 0.0
        %1566 = vmatprep.subr.mxu0 0.0
        %1567 = vmatpush1.msra.mxu0 0.0
        %1568 = vmatprep.subr.mxu0 0.0
        %1569 = vmatpush1.msra.mxu0 0.0
        %1570 = vmatprep.subr.mxu0 0.0
        %1571 = vmatpush1.msra.mxu0 0.0
        %1572 = vmatprep.subr.mxu0 0.0
        %1573 = vmatpush1.msra.mxu0 0.0
        %1574 = vmatprep.subr.mxu0 0.0
        %1575 = vmatpush1.msra.mxu0 0.0
        %1576 = vmatprep.subr.mxu0 0.0
        %1577 = vmatpush1.msra.mxu0 0.0
        %1578 = vmatprep.subr.mxu0 0.0
        %1579 = vmatpush1.msra.mxu0 0.0
        %1580 = vmatprep.subr.mxu0 0.0
        %1581 = vmatpush1.msra.mxu0 0.0
        %1582 = vmatprep.subr.mxu0 0.0
        %1583 = vmatpush1.msra.mxu0 0.0
        %1584 = vmatprep.subr.mxu0 0.0
        %1585 = vmatpush1.msra.mxu0 0.0
        %1586 = vmatprep.subr.mxu0 0.0
        %1587 = vmatpush1.msra.mxu0 0.0
        %1588 = vmatprep.subr.mxu0 0.0
        %1589 = vmatpush1.msra.mxu0 %v1550
        %1590 = vmatprep.subr.mxu0 0.0
        %1591 = vmatpush1.msra.mxu0 %v1549
        %1592 = vmatprep.subr.mxu0 0.0
        %1593 = vmatpush2.msra.mxu0 0.0
        %1594 = vmatprep.subr.mxu0 0.0
        %1595 = vmatpush2.msra.mxu0 0.0
        %1596 = vmatprep.subr.mxu0 0.0
        %1597 = vmatpush2.msra.mxu0 0.0
        %1598 = vmatprep.subr.mxu0 0.0
        %1599 = vmatpush2.msra.mxu0 0.0
        %1600 = vmatprep.subr.mxu0 0.0
        %1601 = vmatpush2.msra.mxu0 0.0
        %1602 = vmatprep.subr.mxu0 0.0
        %1603 = vmatpush2.msra.mxu0 0.0
        %1604 = vmatprep.subr.mxu0 0.0
        %1605 = vmatpush2.msra.mxu0 0.0
        %1606 = vmatprep.subr.mxu0 0.0
        %1607 = vmatpush2.msra.mxu0 0.0
        %1608 = vmatprep.subr.mxu0 0.0
        %1609 = vmatpush2.msra.mxu0 0.0
        %1610 = vmatprep.subr.mxu0 0.0
        %1611 = vmatpush2.msra.mxu0 0.0
        %1612 = vmatprep.subr.mxu0 0.0
        %1613 = vmatpush2.msra.mxu0 0.0
        %1614 = vmatprep.subr.mxu0 0.0
        %1615 = vmatpush2.msra.mxu0 0.0
        %1616 = vmatprep.subr.mxu0 0.0
        %1617 = vmatpush2.msra.mxu0 0.0
        %1618 = vmatprep.subr.mxu0 0.0
        %1619 = vmatpush2.msra.mxu0 0.0
        %1620 = vmatprep.subr.mxu0 0.0
        %1621 = vmatpush2.msra.mxu0 0.0
        %1622 = vmatprep.subr.mxu0 0.0
        %1623 = vmatpush2.msra.mxu0 0.0
        %1624 = vmatprep.mubr.f32.mxu0 0.0
        %1625 = vmatmul.mubr.f32.gmra.mxu0 %v1558
        %v1626 = vpop.f32.mrf.mxu0
        %v1627 = vadd.f32 0.0, %v1626
        %v1628 = vpop.f32.mrf.mxu0
        %1629 = vdwg.mxu0
        %v1631 = vsel %vm888, %v1394, 0
        %1633 = vmatprep.subr.mxu0 0.0
        %1634 = vmatpush1.msra.mxu0 0.0
        %1635 = vmatprep.subr.mxu0 0.0
        %1636 = vmatpush1.msra.mxu0 0.0
        %1637 = vmatprep.subr.mxu0 0.0
        %1638 = vmatpush1.msra.mxu0 0.0
        %1639 = vmatprep.subr.mxu0 0.0
        %1640 = vmatpush1.msra.mxu0 0.0
        %1641 = vmatprep.subr.mxu0 0.0
        %1642 = vmatpush1.msra.mxu0 0.0
        %1643 = vmatprep.subr.mxu0 0.0
        %1644 = vmatpush1.msra.mxu0 0.0
        %1645 = vmatprep.subr.mxu0 0.0
        %1646 = vmatpush1.msra.mxu0 0.0
        %1647 = vmatprep.subr.mxu0 0.0
        %1648 = vmatpush1.msra.mxu0 0.0
        %1649 = vmatprep.subr.mxu0 0.0
        %1650 = vmatpush1.msra.mxu0 0.0
        %1651 = vmatprep.subr.mxu0 0.0
        %1652 = vmatpush1.msra.mxu0 0.0
        %1653 = vmatprep.subr.mxu0 0.0
        %1654 = vmatpush1.msra.mxu0 0.0
        %1655 = vmatprep.subr.mxu0 0.0
        %1656 = vmatpush1.msra.mxu0 0.0
        %1657 = vmatprep.subr.mxu0 0.0
        %1658 = vmatpush1.msra.mxu0 0.0
        %1659 = vmatprep.subr.mxu0 0.0
        %1660 = vmatpush1.msra.mxu0 0.0
        %1661 = vmatprep.subr.mxu0 0.0
        %1662 = vmatpush1.msra.mxu0 %v1552
        %1663 = vmatprep.subr.mxu0 0.0
        %1664 = vmatpush1.msra.mxu0 %v1551
        %1665 = vmatprep.subr.mxu0 0.0
        %1666 = vmatpush2.msra.mxu0 0.0
        %1667 = vmatprep.subr.mxu0 0.0
        %1668 = vmatpush2.msra.mxu0 0.0
        %1669 = vmatprep.subr.mxu0 0.0
        %1670 = vmatpush2.msra.mxu0 0.0
        %1671 = vmatprep.subr.mxu0 0.0
        %1672 = vmatpush2.msra.mxu0 0.0
        %1673 = vmatprep.subr.mxu0 0.0
        %1674 = vmatpush2.msra.mxu0 0.0
        %1675 = vmatprep.subr.mxu0 0.0
        %1676 = vmatpush2.msra.mxu0 0.0
        %1677 = vmatprep.subr.mxu0 0.0
        %1678 = vmatpush2.msra.mxu0 0.0
        %1679 = vmatprep.subr.mxu0 0.0
        %1680 = vmatpush2.msra.mxu0 0.0
        %1681 = vmatprep.subr.mxu0 0.0
        %1682 = vmatpush2.msra.mxu0 0.0
        %1683 = vmatprep.subr.mxu0 0.0
        %1684 = vmatpush2.msra.mxu0 0.0
        %1685 = vmatprep.subr.mxu0 0.0
        %1686 = vmatpush2.msra.mxu0 0.0
        %1687 = vmatprep.subr.mxu0 0.0
        %1688 = vmatpush2.msra.mxu0 0.0
        %1689 = vmatprep.subr.mxu0 0.0
        %1690 = vmatpush2.msra.mxu0 0.0
        %1691 = vmatprep.subr.mxu0 0.0
        %1692 = vmatpush2.msra.mxu0 0.0
        %1693 = vmatprep.subr.mxu0 0.0
        %1694 = vmatpush2.msra.mxu0 0.0
        %1695 = vmatprep.subr.mxu0 0.0
        %1696 = vmatpush2.msra.mxu0 0.0
        %1697 = vmatprep.mubr.f32.mxu0 0.0
        %1698 = vmatmul.mubr.f32.gmra.mxu0 %v1631
        %v1699 = vpop.f32.mrf.mxu0
        %v1700 = vadd.f32 0.0, %v1699
        %v1701 = vpop.f32.mrf.mxu0
        %1702 = vdwg.mxu0
        %v1704 = vsel %vm888, %v1470, 0
        %1706 = vmatprep.subr.mxu0 0.0
        %1707 = vmatpush1.msra.mxu0 0.0
        %1708 = vmatprep.subr.mxu0 0.0
        %1709 = vmatpush1.msra.mxu0 0.0
        %1710 = vmatprep.subr.mxu0 0.0
        %1711 = vmatpush1.msra.mxu0 0.0
        %1712 = vmatprep.subr.mxu0 0.0
        %1713 = vmatpush1.msra.mxu0 0.0
        %1714 = vmatprep.subr.mxu0 0.0
        %1715 = vmatpush1.msra.mxu0 0.0
        %1716 = vmatprep.subr.mxu0 0.0
        %1717 = vmatpush1.msra.mxu0 0.0
        %1718 = vmatprep.subr.mxu0 0.0
        %1719 = vmatpush1.msra.mxu0 0.0
        %1720 = vmatprep.subr.mxu0 0.0
        %1721 = vmatpush1.msra.mxu0 0.0
        %1722 = vmatprep.subr.mxu0 0.0
        %1723 = vmatpush1.msra.mxu0 0.0
        %1724 = vmatprep.subr.mxu0 0.0
        %1725 = vmatpush1.msra.mxu0 0.0
        %1726 = vmatprep.subr.mxu0 0.0
        %1727 = vmatpush1.msra.mxu0 0.0
        %1728 = vmatprep.subr.mxu0 0.0
        %1729 = vmatpush1.msra.mxu0 0.0
        %1730 = vmatprep.subr.mxu0 0.0
        %1731 = vmatpush1.msra.mxu0 0.0
        %1732 = vmatprep.subr.mxu0 0.0
        %1733 = vmatpush1.msra.mxu0 0.0
        %1734 = vmatprep.subr.mxu0 0.0
        %1735 = vmatpush1.msra.mxu0 %v1554
        %1736 = vmatprep.subr.mxu0 0.0
        %1737 = vmatpush1.msra.mxu0 %v1553
        %1738 = vmatprep.subr.mxu0 0.0
        %1739 = vmatpush2.msra.mxu0 0.0
        %1740 = vmatprep.subr.mxu0 0.0
        %1741 = vmatpush2.msra.mxu0 0.0
        %1742 = vmatprep.subr.mxu0 0.0
        %1743 = vmatpush2.msra.mxu0 0.0
        %1744 = vmatprep.subr.mxu0 0.0
        %1745 = vmatpush2.msra.mxu0 0.0
        %1746 = vmatprep.subr.mxu0 0.0
        %1747 = vmatpush2.msra.mxu0 0.0
        %1748 = vmatprep.subr.mxu0 0.0
        %1749 = vmatpush2.msra.mxu0 0.0
        %1750 = vmatprep.subr.mxu0 0.0
        %1751 = vmatpush2.msra.mxu0 0.0
        %1752 = vmatprep.subr.mxu0 0.0
        %1753 = vmatpush2.msra.mxu0 0.0
        %1754 = vmatprep.subr.mxu0 0.0
        %1755 = vmatpush2.msra.mxu0 0.0
        %1756 = vmatprep.subr.mxu0 0.0
        %1757 = vmatpush2.msra.mxu0 0.0
        %1758 = vmatprep.subr.mxu0 0.0
        %1759 = vmatpush2.msra.mxu0 0.0
        %1760 = vmatprep.subr.mxu0 0.0
        %1761 = vmatpush2.msra.mxu0 0.0
        %1762 = vmatprep.subr.mxu0 0.0
        %1763 = vmatpush2.msra.mxu0 0.0
        %1764 = vmatprep.subr.mxu0 0.0
        %1765 = vmatpush2.msra.mxu0 0.0
        %1766 = vmatprep.subr.mxu0 0.0
        %1767 = vmatpush2.msra.mxu0 0.0
        %1768 = vmatprep.subr.mxu0 0.0
        %1769 = vmatpush2.msra.mxu0 0.0
        %1770 = vmatprep.mubr.f32.mxu0 0.0
        %1771 = vmatmul.mubr.f32.gmra.mxu0 %v1704
        %v1772 = vpop.f32.mrf.mxu0
        %v1773 = vadd.f32 0.0, %v1772
        %v1774 = vpop.f32.mrf.mxu0
        %1775 = vdwg.mxu0
        %v1777 = vsel %vm888, %v1546, 0
        %1779 = vmatprep.subr.mxu0 0.0
        %1780 = vmatpush1.msra.mxu0 0.0
        %1781 = vmatprep.subr.mxu0 0.0
        %1782 = vmatpush1.msra.mxu0 0.0
        %1783 = vmatprep.subr.mxu0 0.0
        %1784 = vmatpush1.msra.mxu0 0.0
        %1785 = vmatprep.subr.mxu0 0.0
        %1786 = vmatpush1.msra.mxu0 0.0
        %1787 = vmatprep.subr.mxu0 0.0
        %1788 = vmatpush1.msra.mxu0 0.0
        %1789 = vmatprep.subr.mxu0 0.0
        %1790 = vmatpush1.msra.mxu0 0.0
        %1791 = vmatprep.subr.mxu0 0.0
        %1792 = vmatpush1.msra.mxu0 0.0
        %1793 = vmatprep.subr.mxu0 0.0
        %1794 = vmatpush1.msra.mxu0 0.0
        %1795 = vmatprep.subr.mxu0 0.0
        %1796 = vmatpush1.msra.mxu0 0.0
        %1797 = vmatprep.subr.mxu0 0.0
        %1798 = vmatpush1.msra.mxu0 0.0
        %1799 = vmatprep.subr.mxu0 0.0
        %1800 = vmatpush1.msra.mxu0 0.0
        %1801 = vmatprep.subr.mxu0 0.0
        %1802 = vmatpush1.msra.mxu0 0.0
        %1803 = vmatprep.subr.mxu0 0.0
        %1804 = vmatpush1.msra.mxu0 0.0
        %1805 = vmatprep.subr.mxu0 0.0
        %1806 = vmatpush1.msra.mxu0 0.0
        %1807 = vmatprep.subr.mxu0 0.0
        %1808 = vmatpush1.msra.mxu0 %v1556
        %1809 = vmatprep.subr.mxu0 0.0
        %1810 = vmatpush1.msra.mxu0 %v1555
        %1811 = vmatprep.subr.mxu0 0.0
        %1812 = vmatpush2.msra.mxu0 0.0
        %1813 = vmatprep.subr.mxu0 0.0
        %1814 = vmatpush2.msra.mxu0 0.0
        %1815 = vmatprep.subr.mxu0 0.0
        %1816 = vmatpush2.msra.mxu0 0.0
        %1817 = vmatprep.subr.mxu0 0.0
        %1818 = vmatpush2.msra.mxu0 0.0
        %1819 = vmatprep.subr.mxu0 0.0
        %1820 = vmatpush2.msra.mxu0 0.0
        %1821 = vmatprep.subr.mxu0 0.0
        %1822 = vmatpush2.msra.mxu0 0.0
        %1823 = vmatprep.subr.mxu0 0.0
        %1824 = vmatpush2.msra.mxu0 0.0
        %1825 = vmatprep.subr.mxu0 0.0
        %1826 = vmatpush2.msra.mxu0 0.0
        %1827 = vmatprep.subr.mxu0 0.0
        %1828 = vmatpush2.msra.mxu0 0.0
        %1829 = vmatprep.subr.mxu0 0.0
        %1830 = vmatpush2.msra.mxu0 0.0
        %1831 = vmatprep.subr.mxu0 0.0
        %1832 = vmatpush2.msra.mxu0 0.0
        %1833 = vmatprep.subr.mxu0 0.0
        %1834 = vmatpush2.msra.mxu0 0.0
        %1835 = vmatprep.subr.mxu0 0.0
        %1836 = vmatpush2.msra.mxu0 0.0
        %1837 = vmatprep.subr.mxu0 0.0
        %1838 = vmatpush2.msra.mxu0 0.0
        %1839 = vmatprep.subr.mxu0 0.0
        %1840 = vmatpush2.msra.mxu0 0.0
        %1841 = vmatprep.subr.mxu0 0.0
        %1842 = vmatpush2.msra.mxu0 0.0
        %1843 = vmatprep.mubr.f32.mxu0 0.0
        %1844 = vmatmul.mubr.f32.gmra.mxu0 %v1777
        %v1845 = vpop.f32.mrf.mxu0
        %v1846 = vadd.f32 0.0, %v1845
        %v1847 = vpop.f32.mrf.mxu0
        %1848 = vdwg.mxu0
        %v1849 = vsel %vm382, %v1627, 0.0
        %v1850 = vsel %vm382, %v1700, 0.0
        %v1851 = vadd.f32 %v1849, %v1850
        %v1852 = vsel %vm382, %v1773, 0.0
        %v1853 = vadd.f32 %v1851, %v1852
        %v1854 = vsel %vm382, %v1846, 0.0
        %v1855 = vadd.f32 %v1853, %v1854
        %v1856 = vld [vmem:[%s7] sm:$0x1]
        %v1858 = vlaneseq
        %v1859 = vshrl.u32 %v1858, 7
        %v1860 = vsub.s32 0, %v1859
        %v1861 = vrot.slane %v1856, %v1860
        %v1863 = vadd.f32 %v1855, %v1861
        %1864 = vst.msk [vmem:[%s364] sm:$0xff] %vm382, %v1863
        %p1865 = scmp.lt.s32.totalorder %s20, 1
        %s1866 = scalar_select %p1865, %s20, 1
        %s1867 = smul.addr %s1866, 8
        %s1868 = scalar_lea.vmem %s8, %s1867
        // Predicated region
        $region57: #{graphormer_layer_forward.2} parent=51 // pred_check
          %p1869 = pneg %p226
        $region58: #{graphormer_layer_forward.2} parent=51 // pred_check_branch
          %1871 = sbr.rel (%p1869) target = $region60
        $region59: #{graphormer_layer_forward.2} parent=51 // pred_region
          _
        $region60: #{graphormer_layer_forward.2} parent=51 // pred_fallthru
          _
      $region52: #{graphormer_layer_forward.2} parent=5 // pred_fallthru
        _
      %p1872 = scmp.le.s32.totalorder 2, %s15
      // Predicated region
      $region61: #{graphormer_layer_forward.2} parent=5 // pred_check
        %p1873 = pneg %p1872
      $region62: #{graphormer_layer_forward.2} parent=5 // pred_check_branch
        %1875 = sbr.rel (%p1873) target = $region64
      $region63: #{graphormer_layer_forward.2} parent=5 // pred_region
        %s1876 = ssub.s32 %s15, 2
        // Predicated region
        $region65: #{graphormer_layer_forward.2} parent=63 // pred_check
          %p1877 = pneg %p232
        $region66: #{graphormer_layer_forward.2} parent=63 // pred_check_branch
          %1879 = sbr.rel (%p1877) target = $region68
        $region67: #{graphormer_layer_forward.2} parent=63 // pred_region
          %p1880 = scmp.lt.s32.totalorder %s21, 1
          %s1881 = scalar_select %p1880, %s21, 1
          %s1882 = smul.addr %s1881, 8
          %s1883 = scalar_lea.vmem %s8, %s1882
        $region68: #{graphormer_layer_forward.2} parent=63 // pred_fallthru
          _
      $region64: #{graphormer_layer_forward.2} parent=5 // pred_fallthru
        _
    $region6: #{graphormer_layer_forward.2} parent=1 // loop_footer
      %s19 = sadd.s32 1, %s15
    $region7: #{graphormer_layer_forward.2} parent=1 // loop_footer_branch
      %14 = sbr.rel target = $region3
    $region8: #{graphormer_layer_forward.2} parent=1 // loop_exit
      _
    %1884 = vsyncpa [#allocation3], 1
    %s1885 = scalar_lea.sflag [#allocation3], 1
    %1886 = vsyncpa %s1885, 1

</llo_original>
